<compile_context>
chip_gen: v7x
topology: tpu7x:2x2x1
jax: 0.10.0
libtpu: 0.0.40
codegen_flags: <defaults>
</compile_context>

<pallas_src>
import functools

import jax
import jax.numpy as jnp
from jax.experimental import pallas as pl
from jax.experimental.pallas import tpu as pltpu


# ---------------------------------------------------------------------------
# Fused kernel: conv1 -> conv2 -> conv3 -> flatten -> fc1 -> fc2 (all in VMEM)
# ---------------------------------------------------------------------------
def _encoder_kernel(x_ref, cw1_ref, cb1_ref, cw2_ref, cb2_ref, cw3_ref, cb3_ref,
                    fw1_ref, fb1_ref, fw2_ref, fb2_ref, o_ref, *, b_inner, C2, nsp):
    f32, bf16 = jnp.float32, jnp.bfloat16
    R1 = x_ref.shape[0]          # b_inner * (H//2) * (W//2)  stage-1 positions
    R2 = R1 // 4                 # stage-2 positions
    R3 = R2 // 4                 # stage-3 positions ( == nsp * b_inner )

    # ---- conv1: the 2x2/s2 taps are pre-folded into columns -> single GEMM --
    a1 = jnp.dot(x_ref[...], cw1_ref[...], preferred_element_type=f32)
    a1 = jnp.maximum(a1 + cb1_ref[...], 0.0).astype(bf16)        # one cast post-ReLU

    # ---- conv2: 4 per-tap GEMMs over contiguous row blocks -------------------
    acc = jnp.broadcast_to(cb2_ref[...], (R2, C2))                # bias init, no zeros
    for t in range(4):                                            # t = (kh2, kw2)
        acc = acc + jnp.dot(a1[t * R2:(t + 1) * R2, :],
                            cw2_ref[t * C2:(t + 1) * C2, :],
                            preferred_element_type=f32)
    a2 = jnp.maximum(acc, 0.0).astype(bf16)

    # ---- conv3 ---------------------------------------------------------------
    acc = jnp.broadcast_to(cb3_ref[...], (R3, C2))
    for t in range(4):                                            # t = (kh3, kw3)
        acc = acc + jnp.dot(a2[t * R3:(t + 1) * R3, :],
                            cw3_ref[t * C2:(t + 1) * C2, :],
                            preferred_element_type=f32)
    a3 = jnp.maximum(acc, 0.0).astype(bf16)            # rows = (spatial, b_inner)

    # ---- fc1: NCHW flatten absorbed into per-spatial-position GEMM blocks ----
    acc = jnp.broadcast_to(fb1_ref[...], (b_inner, fw1_ref.shape[1]))
    for j in range(nsp):                                          # spatial position
        acc = acc + jnp.dot(a3[j * b_inner:(j + 1) * b_inner, :],
                            fw1_ref[j * C2:(j + 1) * C2, :],
                            preferred_element_type=f32)
    h1 = jnp.maximum(acc, 0.0).astype(bf16)                       # (b_inner, 512)

    # ---- fc2 (output is lane-padded to a multiple of 128) --------------------
    h2 = jnp.dot(h1, fw2_ref[...], preferred_element_type=f32)
    o_ref[...] = jnp.maximum(h2 + fb2_ref[...], 0.0)              # (b_inner, hid_pad)


# ---------------------------------------------------------------------------
# Host-side glue
# ---------------------------------------------------------------------------
def _pack_input(x, b_inner):
    """(B, C, H, W) f32 NCHW -> (B*(H//2)*(W//2), 4*C) bf16 hierarchical
    space-to-depth rows, grouped by b_outer so each grid block is contiguous.

    Row order = (b_outer, kh2, kw2, kh3, kw3, sp_h, sp_w, b_inner)  [b_inner fastest]
    Col order = (kh1, kw1, c)
    """
    B, C, H, W = x.shape
    assert H % 8 == 0 and W % 8 == 0, "hierarchical layout needs H, W % 8 == 0"
    assert B % b_inner == 0
    nb = B // b_inner
    x = x.reshape(nb, b_inner, C, H // 8, 2, 2, 2, W // 8, 2, 2, 2)
    #             0   1        2  3      4  5  6  7      8  9  10
    #             bo  bi       c  sp_h kh3 kh2 kh1 sp_w kw3 kw2 kw1
    x = x.transpose(0, 5, 9, 4, 8, 3, 7, 1, 6, 10, 2)
    return x.reshape(B * (H // 2) * (W // 2), 4 * C).astype(jnp.bfloat16)


def _per_batch_vmem_bytes(C, H, W, hidden_pad):
    """Rough per-batch-element VMEM footprint of one grid block (incl. dbl-buffer)."""
    C2 = 2 * C
    r1 = (H // 2) * (W // 2)
    return (2 * r1 * 4 * C * 2            # bf16 rows block, double-buffered
            + r1 * C2 * 6                 # a1 f32 + bf16
            + (r1 // 4) * C2 * 6          # a2
            + (r1 // 16) * C2 * 6         # a3
            + 512 * 6 + 2 * hidden_pad * 4)


def _pick_batch_block(B, per_batch_bytes, budget=8 << 20):
    """Largest batch block that (a) divides B, (b) is sublane-aligned unless it
    covers the whole batch, (c) fits a conservative (v7x-safe) VMEM budget."""
    cands = [d for d in range(1, B + 1) if B % d == 0 and (d == B or d % 8 == 0)]
    fitting = [d for d in cands if d * per_batch_bytes <= budget]
    return max(fitting) if fitting else min(cands)
    # TODO(synk): on v6e/v5e (128 MiB VMEM) the budget can be ~2-4x larger.


def prepare_kernel_params(p, lane=128):
    """Permute/cast the PyTorch-layout parameters into the kernel layout (once).

    Conv weights -> rows (kh, kw, c_in); fc1 rows reordered from the NCHW
    flatten order (c, h, w) to (h, w, c); fc2 weight/bias zero-padded so the
    output last dim is a multiple of 128 (lane-dense stores); matmul weights
    bf16, biases f32 (1, N) rows.
    """
    C2 = p["conv1_w"].shape[0]
    nsp = p["fc1_w"].shape[1] // C2
    hidden = p["fc2_w"].shape[0]
    hidden_pad = ((hidden + lane - 1) // lane) * lane

    def conv_w(w):                       # (Cout, Cin, 2, 2) -> (4*Cin, Cout)
        return jnp.transpose(w, (2, 3, 1, 0)).reshape(-1, w.shape[0]).astype(jnp.bfloat16)

    def b2(b):
        return b.reshape(1, -1).astype(jnp.float32)

    fw1 = p["fc1_w"].reshape(-1, C2, nsp)                  # (512, c, sp)
    fw1 = jnp.transpose(fw1, (2, 1, 0)).reshape(nsp * C2, -1).astype(jnp.bfloat16)
    fw2 = jnp.pad(p["fc2_w"].T.astype(jnp.bfloat16),       # (512, hidden_pad)
                  ((0, 0), (0, hidden_pad - hidden)))
    fb2 = jnp.pad(p["fc2_b"], (0, hidden_pad - hidden)).reshape(1, -1).astype(jnp.float32)

    return {
        "cw1": conv_w(p["conv1_w"]), "cb1": b2(p["conv1_b"]),
        "cw2": conv_w(p["conv2_w"]), "cb2": b2(p["conv2_b"]),
        "cw3": conv_w(p["conv3_w"]), "cb3": b2(p["conv3_b"]),
        "fw1": fw1, "fb1": b2(p["fc1_b"]),
        "fw2": fw2, "fb2": fb2,
    }


@functools.partial(jax.jit, static_argnames=("hidden",))
def encoder_forward(x, kp, hidden):
    """Fused Encoder forward.  x: (B, C, H, W) or (C, H, W), float32 NCHW."""
    if x.ndim == 3:          # torch module also accepts unbatched 3-D obs
        x = x[None]
    B, C, H, W = x.shape
    C2 = kp["cw1"].shape[1]
    hidden_pad = kp["fw2"].shape[1]
    nsp = (H // 8) * (W // 8)

    b_inner = _pick_batch_block(B, _per_batch_vmem_bytes(C, H, W, hidden_pad))
    nb = B // b_inner
    r1_blk = b_inner * (H // 2) * (W // 2)

    rows = _pack_input(x, b_inner)      # single layout conversion, bf16
    kernel = functools.partial(_encoder_kernel, b_inner=b_inner, C2=C2, nsp=nsp)

    weights = (kp["cw1"], kp["cb1"], kp["cw2"], kp["cb2"], kp["cw3"], kp["cb3"],
               kp["fw1"], kp["fb1"], kp["fw2"], kp["fb2"])

    in_specs = [pl.BlockSpec((r1_blk, 4 * C), lambda i: (i, 0))]
    in_specs += [pl.BlockSpec(w.shape, lambda i: (0, 0)) for w in weights]

    out_pad = pl.pallas_call(
        kernel,
        out_shape=jax.ShapeDtypeStruct((B, hidden_pad), jnp.float32),
        grid=(nb,),
        in_specs=in_specs,
        out_specs=pl.BlockSpec((b_inner, hidden_pad), lambda i: (i, 0)),
        compiler_params=pltpu.CompilerParams(
            dimension_semantics=("parallel",),
            vmem_limit_bytes=32 * 1024 * 1024),
    )(rows, *weights)
    return out_pad[:, :hidden]


# ---------------------------------------------------------------------------
# Parameters in PyTorch layouts + pure-JAX reference for the correctness check
# ---------------------------------------------------------------------------
def init_params(key, obs_shape, hidden_dim):
    """PyTorch layouts: Conv2d (Cout, Cin, KH, KW); Linear (out, in); fc1 input
    dim in NCHW-flatten order, exactly like the original module."""
    C, H, W = obs_shape
    C2 = 2 * C
    flat = C2 * (H // 8) * (W // 8)
    ks = jax.random.split(key, 10)

    def w(k, shape, fan_in):
        return jax.random.normal(k, shape, jnp.float32) / jnp.sqrt(fan_in)

    return {
        "conv1_w": w(ks[0], (C2, C, 2, 2), C * 4),
        "conv1_b": 0.1 * jax.random.normal(ks[5], (C2,), jnp.float32),
        "conv2_w": w(ks[1], (C2, C2, 2, 2), C2 * 4),
        "conv2_b": 0.1 * jax.random.normal(ks[6], (C2,), jnp.float32),
        "conv3_w": w(ks[2], (C2, C2, 2, 2), C2 * 4),
        "conv3_b": 0.1 * jax.random.normal(ks[7], (C2,), jnp.float32),
        "fc1_w": w(ks[3], (512, flat), flat),
        "fc1_b": 0.1 * jax.random.normal(ks[8], (512,), jnp.float32),
        "fc2_w": w(ks[4], (hidden_dim, 512), 512),
        "fc2_b": 0.1 * jax.random.normal(ks[9], (hidden_dim,), jnp.float32),
    }


def encoder_reference(x, p):
    """Pure-JAX reference in the original PyTorch layouts / NCHW order.  Matmul
    operands are cast to bf16 exactly like the kernel, so the comparison checks
    wiring & layout permutations rather than the dtype policy."""
    bf16, f32 = jnp.bfloat16, jnp.float32

    def conv2x2_s2_relu(x, w, b):                      # x NCHW, w (Cout,Cin,2,2)
        B, C, H, W = x.shape
        OH, OW = H // 2, W // 2
        patch = x.reshape(B, C, OH, 2, OW, 2).transpose(0, 2, 4, 1, 3, 5)
        patch = patch.reshape(B * OH * OW, C * 4)       # cols (c, kh, kw)
        wf = w.reshape(w.shape[0], -1).T                # rows (c, kh, kw)
        o = jnp.dot(patch.astype(bf16), wf.astype(bf16), preferred_element_type=f32)
        o = jnp.maximum(o + b, 0.0)
        return o.reshape(B, OH, OW, -1).transpose(0, 3, 1, 2)

    if x.ndim == 3:
        x = x[None]
    x = conv2x2_s2_relu(x, p["conv1_w"], p["conv1_b"])
    x = conv2x2_s2_relu(x, p["conv2_w"], p["conv2_b"])
    x = conv2x2_s2_relu(x, p["conv3_w"], p["conv3_b"])
    f = x.reshape(x.shape[0], -1)                       # NCHW flatten (torch order)
    h = jnp.dot(f.astype(bf16), p["fc1_w"].T.astype(bf16), preferred_element_type=f32)
    h = jnp.maximum(h + p["fc1_b"], 0.0)
    h = jnp.dot(h.astype(bf16), p["fc2_w"].T.astype(bf16), preferred_element_type=f32)
    return jnp.maximum(h + p["fc2_b"], 0.0)


if __name__ == "__main__":
    obs_shape = (4, 16, 16)   # (C, H, W) -> CNN flatten dim = 8 * 2 * 2 = 32
    hidden_dim = 32
    batch = 2

    key = jax.random.PRNGKey(0)
    k_params, k_x = jax.random.split(key)
    params = init_params(k_params, obs_shape, hidden_dim)       # torch layouts
    kparams = prepare_kernel_params(params)                     # kernel layouts (once)
    x = jax.random.normal(k_x, (batch,) + obs_shape, jnp.float32)   # NCHW input

    out = jax.block_until_ready(encoder_forward(x, kparams, hidden_dim))
    ref = encoder_reference(x, params)

    assert out.shape == (batch, hidden_dim), out.shape
    max_err = float(jnp.max(jnp.abs(out - ref)))
    assert jnp.allclose(out, ref, atol=1e-2, rtol=1e-2), f"mismatch vs reference, max|err|={max_err}"
    print("KERNEL_OK")
</pallas_src>

<mosaic_0001>
module attributes {stable_mosaic.version = 11 : i64} {
  func.func @_encoder_kernel(%arg0: i32, %arg1: memref<128x16xbf16, #tpu.memory_space<vmem>>, %arg2: memref<16x8xbf16, #tpu.memory_space<vmem>>, %arg3: memref<1x8xf32, #tpu.memory_space<vmem>>, %arg4: memref<32x8xbf16, #tpu.memory_space<vmem>>, %arg5: memref<1x8xf32, #tpu.memory_space<vmem>>, %arg6: memref<32x8xbf16, #tpu.memory_space<vmem>>, %arg7: memref<1x8xf32, #tpu.memory_space<vmem>>, %arg8: memref<32x512xbf16, #tpu.memory_space<vmem>>, %arg9: memref<1x512xf32, #tpu.memory_space<vmem>>, %arg10: memref<512x128xbf16, #tpu.memory_space<vmem>>, %arg11: memref<1x128xf32, #tpu.memory_space<vmem>>, %arg12: memref<2x128xf32, #tpu.memory_space<vmem>>) attributes {dimension_semantics = [#tpu.dimension_semantics<parallel>], iteration_bounds = array<i64: 1>, scalar_prefetch = 0 : i64, scratch_operands = 0 : i64, tpu.core_type = #tpu.core_type<tc>, window_params = [{transform_indices = @transform_0, window_bounds = array<i64: 128, 16>}, {pipeline_mode = #tpu.pipeline_mode<synchronous>, transform_indices = @transform_1, window_bounds = array<i64: 16, 8>}, {pipeline_mode = #tpu.pipeline_mode<synchronous>, transform_indices = @transform_2, window_bounds = array<i64: 1, 8>}, {pipeline_mode = #tpu.pipeline_mode<synchronous>, transform_indices = @transform_3, window_bounds = array<i64: 32, 8>}, {pipeline_mode = #tpu.pipeline_mode<synchronous>, transform_indices = @transform_4, window_bounds = array<i64: 1, 8>}, {pipeline_mode = #tpu.pipeline_mode<synchronous>, transform_indices = @transform_5, window_bounds = array<i64: 32, 8>}, {pipeline_mode = #tpu.pipeline_mode<synchronous>, transform_indices = @transform_6, window_bounds = array<i64: 1, 8>}, {pipeline_mode = #tpu.pipeline_mode<synchronous>, transform_indices = @transform_7, window_bounds = array<i64: 32, 512>}, {pipeline_mode = #tpu.pipeline_mode<synchronous>, transform_indices = @transform_8, window_bounds = array<i64: 1, 512>}, {pipeline_mode = #tpu.pipeline_mode<synchronous>, transform_indices = @transform_9, window_bounds = array<i64: 512, 128>}, {pipeline_mode = #tpu.pipeline_mode<synchronous>, transform_indices = @transform_10, window_bounds = array<i64: 1, 128>}, {transform_indices = @transform_11, window_bounds = array<i64: 2, 128>}]} {
    %c0 = arith.constant 0 : index
    %c0_0 = arith.constant 0 : index
    %0 = vector.load %arg1[%c0, %c0_0] : memref<128x16xbf16, #tpu.memory_space<vmem>>, vector<128x16xbf16>
    %c0_1 = arith.constant 0 : index
    %c0_2 = arith.constant 0 : index
    %1 = vector.load %arg2[%c0_1, %c0_2] : memref<16x8xbf16, #tpu.memory_space<vmem>>, vector<16x8xbf16>
    %cst = arith.constant dense<0.000000e+00> : vector<128x8xf32>
    %2 = tpu.matmul %0, %1, %cst {dimension_numbers = #tpu.dot_dimension_numbers<[1], [0], [0], [1], [0, 0, 1, 1], [], []>} : vector<128x16xbf16>, vector<16x8xbf16>, vector<128x8xf32> -> vector<128x8xf32>
    %c0_3 = arith.constant 0 : index
    %c0_4 = arith.constant 0 : index
    %3 = vector.load %arg3[%c0_3, %c0_4] : memref<1x8xf32, #tpu.memory_space<vmem>>, vector<1x8xf32>
    %4 = vector.broadcast %3 : vector<1x8xf32> to vector<128x8xf32>
    %5 = arith.addf %2, %4 : vector<128x8xf32>
    %cst_5 = arith.constant 0.000000e+00 : f32
    %6 = vector.broadcast %cst_5 : f32 to vector<128x8xf32>
    %7 = arith.maximumf %5, %6 : vector<128x8xf32>
    %8 = arith.truncf %7 : vector<128x8xf32> to vector<128x8xbf16>
    %c0_6 = arith.constant 0 : index
    %c0_7 = arith.constant 0 : index
    %9 = vector.load %arg5[%c0_6, %c0_7] : memref<1x8xf32, #tpu.memory_space<vmem>>, vector<1x8xf32>
    %10 = vector.shape_cast %9 : vector<1x8xf32> to vector<1x8xf32>
    %11 = vector.broadcast %10 : vector<1x8xf32> to vector<32x8xf32>
    %12 = vector.extract_strided_slice %8 {offsets = [0, 0], sizes = [32, 8], strides = [1, 1]} : vector<128x8xbf16> to vector<32x8xbf16>
    %c0_8 = arith.constant 0 : index
    %c0_9 = arith.constant 0 : index
    %13 = vector.load %arg4[%c0_8, %c0_9] : memref<32x8xbf16, #tpu.memory_space<vmem>>, vector<8x8xbf16>
    %cst_10 = arith.constant dense<0.000000e+00> : vector<32x8xf32>
    %14 = tpu.matmul %12, %13, %cst_10 {dimension_numbers = #tpu.dot_dimension_numbers<[1], [0], [0], [1], [0, 0, 1, 1], [], []>} : vector<32x8xbf16>, vector<8x8xbf16>, vector<32x8xf32> -> vector<32x8xf32>
    %15 = arith.addf %11, %14 : vector<32x8xf32>
    %16 = vector.extract_strided_slice %8 {offsets = [32, 0], sizes = [32, 8], strides = [1, 1]} : vector<128x8xbf16> to vector<32x8xbf16>
    %c8 = arith.constant 8 : index
    %c0_11 = arith.constant 0 : index
    %17 = vector.load %arg4[%c8, %c0_11] : memref<32x8xbf16, #tpu.memory_space<vmem>>, vector<8x8xbf16>
    %cst_12 = arith.constant dense<0.000000e+00> : vector<32x8xf32>
    %18 = tpu.matmul %16, %17, %cst_12 {dimension_numbers = #tpu.dot_dimension_numbers<[1], [0], [0], [1], [0, 0, 1, 1], [], []>} : vector<32x8xbf16>, vector<8x8xbf16>, vector<32x8xf32> -> vector<32x8xf32>
    %19 = arith.addf %15, %18 : vector<32x8xf32>
    %20 = vector.extract_strided_slice %8 {offsets = [64, 0], sizes = [32, 8], strides = [1, 1]} : vector<128x8xbf16> to vector<32x8xbf16>
    %c16 = arith.constant 16 : index
    %c0_13 = arith.constant 0 : index
    %21 = vector.load %arg4[%c16, %c0_13] : memref<32x8xbf16, #tpu.memory_space<vmem>>, vector<8x8xbf16>
    %cst_14 = arith.constant dense<0.000000e+00> : vector<32x8xf32>
    %22 = tpu.matmul %20, %21, %cst_14 {dimension_numbers = #tpu.dot_dimension_numbers<[1], [0], [0], [1], [0, 0, 1, 1], [], []>} : vector<32x8xbf16>, vector<8x8xbf16>, vector<32x8xf32> -> vector<32x8xf32>
    %23 = arith.addf %19, %22 : vector<32x8xf32>
    %24 = vector.extract_strided_slice %8 {offsets = [96, 0], sizes = [32, 8], strides = [1, 1]} : vector<128x8xbf16> to vector<32x8xbf16>
    %c24 = arith.constant 24 : index
    %c0_15 = arith.constant 0 : index
    %25 = vector.load %arg4[%c24, %c0_15] : memref<32x8xbf16, #tpu.memory_space<vmem>>, vector<8x8xbf16>
    %cst_16 = arith.constant dense<0.000000e+00> : vector<32x8xf32>
    %26 = tpu.matmul %24, %25, %cst_16 {dimension_numbers = #tpu.dot_dimension_numbers<[1], [0], [0], [1], [0, 0, 1, 1], [], []>} : vector<32x8xbf16>, vector<8x8xbf16>, vector<32x8xf32> -> vector<32x8xf32>
    %27 = arith.addf %23, %26 : vector<32x8xf32>
    %cst_17 = arith.constant 0.000000e+00 : f32
    %28 = vector.broadcast %cst_17 : f32 to vector<32x8xf32>
    %29 = arith.maximumf %27, %28 : vector<32x8xf32>
    %30 = arith.truncf %29 : vector<32x8xf32> to vector<32x8xbf16>
    %c0_18 = arith.constant 0 : index
    %c0_19 = arith.constant 0 : index
    %31 = vector.load %arg7[%c0_18, %c0_19] : memref<1x8xf32, #tpu.memory_space<vmem>>, vector<1x8xf32>
    %32 = vector.shape_cast %31 : vector<1x8xf32> to vector<1x8xf32>
    %33 = vector.broadcast %32 : vector<1x8xf32> to vector<8x8xf32>
    %34 = vector.extract_strided_slice %30 {offsets = [0, 0], sizes = [8, 8], strides = [1, 1]} : vector<32x8xbf16> to vector<8x8xbf16>
    %c0_20 = arith.constant 0 : index
    %c0_21 = arith.constant 0 : index
    %35 = vector.load %arg6[%c0_20, %c0_21] : memref<32x8xbf16, #tpu.memory_space<vmem>>, vector<8x8xbf16>
    %cst_22 = arith.constant dense<0.000000e+00> : vector<8x8xf32>
    %36 = tpu.matmul %34, %35, %cst_22 {dimension_numbers = #tpu.dot_dimension_numbers<[1], [0], [0], [1], [0, 0, 1, 1], [], []>} : vector<8x8xbf16>, vector<8x8xbf16>, vector<8x8xf32> -> vector<8x8xf32>
    %37 = arith.addf %33, %36 : vector<8x8xf32>
    %38 = vector.extract_strided_slice %30 {offsets = [8, 0], sizes = [8, 8], strides = [1, 1]} : vector<32x8xbf16> to vector<8x8xbf16>
    %c8_23 = arith.constant 8 : index
    %c0_24 = arith.constant 0 : index
    %39 = vector.load %arg6[%c8_23, %c0_24] : memref<32x8xbf16, #tpu.memory_space<vmem>>, vector<8x8xbf16>
    %cst_25 = arith.constant dense<0.000000e+00> : vector<8x8xf32>
    %40 = tpu.matmul %38, %39, %cst_25 {dimension_numbers = #tpu.dot_dimension_numbers<[1], [0], [0], [1], [0, 0, 1, 1], [], []>} : vector<8x8xbf16>, vector<8x8xbf16>, vector<8x8xf32> -> vector<8x8xf32>
    %41 = arith.addf %37, %40 : vector<8x8xf32>
    %42 = vector.extract_strided_slice %30 {offsets = [16, 0], sizes = [8, 8], strides = [1, 1]} : vector<32x8xbf16> to vector<8x8xbf16>
    %c16_26 = arith.constant 16 : index
    %c0_27 = arith.constant 0 : index
    %43 = vector.load %arg6[%c16_26, %c0_27] : memref<32x8xbf16, #tpu.memory_space<vmem>>, vector<8x8xbf16>
    %cst_28 = arith.constant dense<0.000000e+00> : vector<8x8xf32>
    %44 = tpu.matmul %42, %43, %cst_28 {dimension_numbers = #tpu.dot_dimension_numbers<[1], [0], [0], [1], [0, 0, 1, 1], [], []>} : vector<8x8xbf16>, vector<8x8xbf16>, vector<8x8xf32> -> vector<8x8xf32>
    %45 = arith.addf %41, %44 : vector<8x8xf32>
    %46 = vector.extract_strided_slice %30 {offsets = [24, 0], sizes = [8, 8], strides = [1, 1]} : vector<32x8xbf16> to vector<8x8xbf16>
    %c24_29 = arith.constant 24 : index
    %c0_30 = arith.constant 0 : index
    %47 = vector.load %arg6[%c24_29, %c0_30] : memref<32x8xbf16, #tpu.memory_space<vmem>>, vector<8x8xbf16>
    %cst_31 = arith.constant dense<0.000000e+00> : vector<8x8xf32>
    %48 = tpu.matmul %46, %47, %cst_31 {dimension_numbers = #tpu.dot_dimension_numbers<[1], [0], [0], [1], [0, 0, 1, 1], [], []>} : vector<8x8xbf16>, vector<8x8xbf16>, vector<8x8xf32> -> vector<8x8xf32>
    %49 = arith.addf %45, %48 : vector<8x8xf32>
    %cst_32 = arith.constant 0.000000e+00 : f32
    %50 = vector.broadcast %cst_32 : f32 to vector<8x8xf32>
    %51 = arith.maximumf %49, %50 : vector<8x8xf32>
    %52 = arith.truncf %51 : vector<8x8xf32> to vector<8x8xbf16>
    %c0_33 = arith.constant 0 : index
    %c0_34 = arith.constant 0 : index
    %53 = vector.load %arg9[%c0_33, %c0_34] : memref<1x512xf32, #tpu.memory_space<vmem>>, vector<1x512xf32>
    %54 = vector.shape_cast %53 : vector<1x512xf32> to vector<1x512xf32>
    %55 = vector.broadcast %54 : vector<1x512xf32> to vector<2x512xf32>
    %56 = vector.extract_strided_slice %52 {offsets = [0, 0], sizes = [2, 8], strides = [1, 1]} : vector<8x8xbf16> to vector<2x8xbf16>
    %c0_35 = arith.constant 0 : index
    %c0_36 = arith.constant 0 : index
    %57 = vector.load %arg8[%c0_35, %c0_36] : memref<32x512xbf16, #tpu.memory_space<vmem>>, vector<8x512xbf16>
    %cst_37 = arith.constant dense<0.000000e+00> : vector<2x512xf32>
    %58 = tpu.matmul %56, %57, %cst_37 {dimension_numbers = #tpu.dot_dimension_numbers<[1], [0], [0], [1], [0, 0, 1, 1], [], []>} : vector<2x8xbf16>, vector<8x512xbf16>, vector<2x512xf32> -> vector<2x512xf32>
    %59 = arith.addf %55, %58 : vector<2x512xf32>
    %60 = vector.extract_strided_slice %52 {offsets = [2, 0], sizes = [2, 8], strides = [1, 1]} : vector<8x8xbf16> to vector<2x8xbf16>
    %c8_38 = arith.constant 8 : index
    %c0_39 = arith.constant 0 : index
    %61 = vector.load %arg8[%c8_38, %c0_39] : memref<32x512xbf16, #tpu.memory_space<vmem>>, vector<8x512xbf16>
    %cst_40 = arith.constant dense<0.000000e+00> : vector<2x512xf32>
    %62 = tpu.matmul %60, %61, %cst_40 {dimension_numbers = #tpu.dot_dimension_numbers<[1], [0], [0], [1], [0, 0, 1, 1], [], []>} : vector<2x8xbf16>, vector<8x512xbf16>, vector<2x512xf32> -> vector<2x512xf32>
    %63 = arith.addf %59, %62 : vector<2x512xf32>
    %64 = vector.extract_strided_slice %52 {offsets = [4, 0], sizes = [2, 8], strides = [1, 1]} : vector<8x8xbf16> to vector<2x8xbf16>
    %c16_41 = arith.constant 16 : index
    %c0_42 = arith.constant 0 : index
    %65 = vector.load %arg8[%c16_41, %c0_42] : memref<32x512xbf16, #tpu.memory_space<vmem>>, vector<8x512xbf16>
    %cst_43 = arith.constant dense<0.000000e+00> : vector<2x512xf32>
    %66 = tpu.matmul %64, %65, %cst_43 {dimension_numbers = #tpu.dot_dimension_numbers<[1], [0], [0], [1], [0, 0, 1, 1], [], []>} : vector<2x8xbf16>, vector<8x512xbf16>, vector<2x512xf32> -> vector<2x512xf32>
    %67 = arith.addf %63, %66 : vector<2x512xf32>
    %68 = vector.extract_strided_slice %52 {offsets = [6, 0], sizes = [2, 8], strides = [1, 1]} : vector<8x8xbf16> to vector<2x8xbf16>
    %c24_44 = arith.constant 24 : index
    %c0_45 = arith.constant 0 : index
    %69 = vector.load %arg8[%c24_44, %c0_45] : memref<32x512xbf16, #tpu.memory_space<vmem>>, vector<8x512xbf16>
    %cst_46 = arith.constant dense<0.000000e+00> : vector<2x512xf32>
    %70 = tpu.matmul %68, %69, %cst_46 {dimension_numbers = #tpu.dot_dimension_numbers<[1], [0], [0], [1], [0, 0, 1, 1], [], []>} : vector<2x8xbf16>, vector<8x512xbf16>, vector<2x512xf32> -> vector<2x512xf32>
    %71 = arith.addf %67, %70 : vector<2x512xf32>
    %cst_47 = arith.constant 0.000000e+00 : f32
    %72 = vector.broadcast %cst_47 : f32 to vector<2x512xf32>
    %73 = arith.maximumf %71, %72 : vector<2x512xf32>
    %74 = arith.truncf %73 : vector<2x512xf32> to vector<2x512xbf16>
    %c0_48 = arith.constant 0 : index
    %c0_49 = arith.constant 0 : index
    %75 = vector.load %arg10[%c0_48, %c0_49] : memref<512x128xbf16, #tpu.memory_space<vmem>>, vector<512x128xbf16>
    %cst_50 = arith.constant dense<0.000000e+00> : vector<2x128xf32>
    %76 = tpu.matmul %74, %75, %cst_50 {dimension_numbers = #tpu.dot_dimension_numbers<[1], [0], [0], [1], [0, 0, 1, 1], [], []>} : vector<2x512xbf16>, vector<512x128xbf16>, vector<2x128xf32> -> vector<2x128xf32>
    %c0_51 = arith.constant 0 : index
    %c0_52 = arith.constant 0 : index
    %77 = vector.load %arg11[%c0_51, %c0_52] : memref<1x128xf32, #tpu.memory_space<vmem>>, vector<1x128xf32>
    %78 = vector.broadcast %77 : vector<1x128xf32> to vector<2x128xf32>
    %79 = arith.addf %76, %78 : vector<2x128xf32>
    %cst_53 = arith.constant 0.000000e+00 : f32
    %80 = vector.broadcast %cst_53 : f32 to vector<2x128xf32>
    %81 = arith.maximumf %79, %80 : vector<2x128xf32>
    %c0_54 = arith.constant 0 : index
    %c0_55 = arith.constant 0 : index
    %82 = vector.load %arg12[%c0_54, %c0_55] : memref<2x128xf32, #tpu.memory_space<vmem>>, vector<2x128xf32>
    tpu.vector_store %arg12[%c0_54, %c0_55], %81 {strides = array<i32>} : memref<2x128xf32, #tpu.memory_space<vmem>>, vector<2x128xf32>,
    return
  }
  func.func @transform_0(%arg0: i32) -> (i32, i32) {
    %c0_i32 = arith.constant 0 : i32
    %c0_i32_0 = arith.constant 0 : i32
    return %arg0, %c0_i32 : i32, i32
  }
  func.func @transform_1(%arg0: i32) -> (i32, i32) {
    %c0_i32 = arith.constant 0 : i32
    %c0_i32_0 = arith.constant 0 : i32
    %c0_i32_1 = arith.constant 0 : i32
    return %c0_i32, %c0_i32_0 : i32, i32
  }
  func.func @transform_2(%arg0: i32) -> (i32, i32) {
    %c0_i32 = arith.constant 0 : i32
    %c0_i32_0 = arith.constant 0 : i32
    %c0_i32_1 = arith.constant 0 : i32
    return %c0_i32, %c0_i32_0 : i32, i32
  }
  func.func @transform_3(%arg0: i32) -> (i32, i32) {
    %c0_i32 = arith.constant 0 : i32
    %c0_i32_0 = arith.constant 0 : i32
    %c0_i32_1 = arith.constant 0 : i32
    return %c0_i32, %c0_i32_0 : i32, i32
  }
  func.func @transform_4(%arg0: i32) -> (i32, i32) {
    %c0_i32 = arith.constant 0 : i32
    %c0_i32_0 = arith.constant 0 : i32
    %c0_i32_1 = arith.constant 0 : i32
    return %c0_i32, %c0_i32_0 : i32, i32
  }
  func.func @transform_5(%arg0: i32) -> (i32, i32) {
    %c0_i32 = arith.constant 0 : i32
    %c0_i32_0 = arith.constant 0 : i32
    %c0_i32_1 = arith.constant 0 : i32
    return %c0_i32, %c0_i32_0 : i32, i32
  }
  func.func @transform_6(%arg0: i32) -> (i32, i32) {
    %c0_i32 = arith.constant 0 : i32
    %c0_i32_0 = arith.constant 0 : i32
    %c0_i32_1 = arith.constant 0 : i32
    return %c0_i32, %c0_i32_0 : i32, i32
  }
  func.func @transform_7(%arg0: i32) -> (i32, i32) {
    %c0_i32 = arith.constant 0 : i32
    %c0_i32_0 = arith.constant 0 : i32
    %c0_i32_1 = arith.constant 0 : i32
    return %c0_i32, %c0_i32_0 : i32, i32
  }
  func.func @transform_8(%arg0: i32) -> (i32, i32) {
    %c0_i32 = arith.constant 0 : i32
    %c0_i32_0 = arith.constant 0 : i32
    %c0_i32_1 = arith.constant 0 : i32
    return %c0_i32, %c0_i32_0 : i32, i32
  }
  func.func @transform_9(%arg0: i32) -> (i32, i32) {
    %c0_i32 = arith.constant 0 : i32
    %c0_i32_0 = arith.constant 0 : i32
    %c0_i32_1 = arith.constant 0 : i32
    return %c0_i32, %c0_i32_0 : i32, i32
  }
  func.func @transform_10(%arg0: i32) -> (i32, i32) {
    %c0_i32 = arith.constant 0 : i32
    %c0_i32_0 = arith.constant 0 : i32
    %c0_i32_1 = arith.constant 0 : i32
    return %c0_i32, %c0_i32_0 : i32, i32
  }
  func.func @transform_11(%arg0: i32) -> (i32, i32) {
    %c0_i32 = arith.constant 0 : i32
    %c0_i32_0 = arith.constant 0 : i32
    return %arg0, %c0_i32 : i32, i32
  }
}

</mosaic_0001>

<llo_original>
// kernel: encoder_forward.1
$region0: #{encoder_forward.1}
  #allocation0 [shape = 'u32[]', space=smem, size = 0x4, offset = 0x4, fixed_abs, tag = 'smem constant byte address 0x4 - core index']
  #allocation1 [shape = 'u32[144,128]{1,0:T(1,128)}', space=vmem, size = 0x12000, scoped, tag = 'internal scratch']
  %s0 = inlined_call_operand.vmem [shape: bf16[128,16], index: 0, kind: input, shape index: {}]
  %s1 = inlined_call_operand.vmem [shape: bf16[16,8], index: 1, kind: input, shape index: {}]
  %s2 = inlined_call_operand.vmem [shape: f32[1,8], index: 2, kind: input, shape index: {}]
  %s3 = inlined_call_operand.vmem [shape: bf16[32,8], index: 3, kind: input, shape index: {}]
  %s4 = inlined_call_operand.vmem [shape: f32[1,8], index: 4, kind: input, shape index: {}]
  %s5 = inlined_call_operand.vmem [shape: bf16[32,8], index: 5, kind: input, shape index: {}]
  %s6 = inlined_call_operand.vmem [shape: f32[1,8], index: 6, kind: input, shape index: {}]
  %s7 = inlined_call_operand.vmem [shape: bf16[32,512], index: 7, kind: input, shape index: {}]
  %s8 = inlined_call_operand.vmem [shape: f32[1,512], index: 8, kind: input, shape index: {}]
  %s9 = inlined_call_operand.vmem [shape: bf16[512,128], index: 9, kind: input, shape index: {}]
  %s10 = inlined_call_operand.vmem [shape: f32[1,128], index: 10, kind: input, shape index: {}]
  %s11 = inlined_call_operand.hbm [shape: f32[2,128], index: 11, kind: output, shape index: {}]
  %s12 = sld [smem:[#allocation0]]
  $region54: #{encoder_forward.1} parent=0
    _
  %s14 = ssub.s32 1, %s12
  %s15 = scalar_select 0, %s14, %s12
  $region1: #{encoder_forward.1} parent=0
    #allocation2 [shape = 'u8[1024]{0}', space=vmem, size = 0x400, scoped, tag = 'output window, operand 0, single buffered']
    #allocation3 [shape = 's32[1]{0}', space=sflag, size = 0x4, scoped, tag = 'scoped memory for encoder_forward.1']
    %16 = vsyncpa [#allocation3], 0
    // Predicated region
    $region2: #{encoder_forward.1} parent=1 // pred_check
      _
    $region3: #{encoder_forward.1} parent=1 // pred_check_branch
      %18 = sbr.rel (0) target = $region5
    $region4: #{encoder_forward.1} parent=1 // pred_region
      _
    $region5: #{encoder_forward.1} parent=1 // pred_fallthru
      _
    // Predicated region
    $region6: #{encoder_forward.1} parent=1 // pred_check
      _
    $region7: #{encoder_forward.1} parent=1 // pred_check_branch
      %20 = sbr.rel (0) target = $region9
    $region8: #{encoder_forward.1} parent=1 // pred_region
      _
    $region9: #{encoder_forward.1} parent=1 // pred_fallthru
      _
    // Predicated region
    $region10: #{encoder_forward.1} parent=1 // pred_check
      _
    $region11: #{encoder_forward.1} parent=1 // pred_check_branch
      %22 = sbr.rel (0) target = $region13
    $region12: #{encoder_forward.1} parent=1 // pred_region
      _
    $region13: #{encoder_forward.1} parent=1 // pred_fallthru
      _
    // Predicated region
    $region14: #{encoder_forward.1} parent=1 // pred_check
      _
    $region15: #{encoder_forward.1} parent=1 // pred_check_branch
      %24 = sbr.rel (0) target = $region17
    $region16: #{encoder_forward.1} parent=1 // pred_region
      _
    $region17: #{encoder_forward.1} parent=1 // pred_fallthru
      _
    // Predicated region
    $region18: #{encoder_forward.1} parent=1 // pred_check
      _
    $region19: #{encoder_forward.1} parent=1 // pred_check_branch
      %26 = sbr.rel (0) target = $region21
    $region20: #{encoder_forward.1} parent=1 // pred_region
      _
    $region21: #{encoder_forward.1} parent=1 // pred_fallthru
      _
    // Predicated region
    $region22: #{encoder_forward.1} parent=1 // pred_check
      _
    $region23: #{encoder_forward.1} parent=1 // pred_check_branch
      %28 = sbr.rel (0) target = $region25
    $region24: #{encoder_forward.1} parent=1 // pred_region
      _
    $region25: #{encoder_forward.1} parent=1 // pred_fallthru
      _
    // Predicated region
    $region26: #{encoder_forward.1} parent=1 // pred_check
      _
    $region27: #{encoder_forward.1} parent=1 // pred_check_branch
      %30 = sbr.rel (0) target = $region29
    $region28: #{encoder_forward.1} parent=1 // pred_region
      _
    $region29: #{encoder_forward.1} parent=1 // pred_fallthru
      _
    // Predicated region
    $region30: #{encoder_forward.1} parent=1 // pred_check
      _
    $region31: #{encoder_forward.1} parent=1 // pred_check_branch
      %32 = sbr.rel (0) target = $region33
    $region32: #{encoder_forward.1} parent=1 // pred_region
      _
    $region33: #{encoder_forward.1} parent=1 // pred_fallthru
      _
    // Predicated region
    $region34: #{encoder_forward.1} parent=1 // pred_check
      _
    $region35: #{encoder_forward.1} parent=1 // pred_check_branch
      %34 = sbr.rel (0) target = $region37
    $region36: #{encoder_forward.1} parent=1 // pred_region
      _
    $region37: #{encoder_forward.1} parent=1 // pred_fallthru
      _
    // Predicated region
    $region38: #{encoder_forward.1} parent=1 // pred_check
      _
    $region39: #{encoder_forward.1} parent=1 // pred_check_branch
      %36 = sbr.rel (0) target = $region41
    $region40: #{encoder_forward.1} parent=1 // pred_region
      _
    $region41: #{encoder_forward.1} parent=1 // pred_fallthru
      _
    // Predicated region
    $region42: #{encoder_forward.1} parent=1 // pred_check
      _
    $region43: #{encoder_forward.1} parent=1 // pred_check_branch
      %38 = sbr.rel (0) target = $region45
    $region44: #{encoder_forward.1} parent=1 // pred_region
      _
    $region45: #{encoder_forward.1} parent=1 // pred_fallthru
      _
    %v40 = vld [vmem:[%s0] sm:$0xf]
    %v41 = vld [vmem:[%s0 + $0x4] sm:$0xf]
    %v42 = vld [vmem:[%s0 + $0x8] sm:$0xf]
    %v43 = vld [vmem:[%s0 + $0xc] sm:$0xf]
    %v44 = vld [vmem:[%s0 + $0x10] sm:$0xf]
    %v45 = vld [vmem:[%s0 + $0x14] sm:$0xf]
    %v46 = vld [vmem:[%s0 + $0x18] sm:$0xf]
    %v47 = vld [vmem:[%s0 + $0x1c] sm:$0xf]
    %v48 = vld [vmem:[%s0 + $0x20] sm:$0xf]
    %v49 = vld [vmem:[%s0 + $0x24] sm:$0xf]
    %v50 = vld [vmem:[%s0 + $0x28] sm:$0xf]
    %v51 = vld [vmem:[%s0 + $0x2c] sm:$0xf]
    %v52 = vld [vmem:[%s0 + $0x30] sm:$0xf]
    %v53 = vld [vmem:[%s0 + $0x34] sm:$0xf]
    %v54 = vld [vmem:[%s0 + $0x38] sm:$0xf]
    %v55 = vld [vmem:[%s0 + $0x3c] sm:$0xf]
    %v56 = vld [vmem:[%s1] sm:$0xf]
    %v57 = vld [vmem:[%s1 + $0x4] sm:$0xf]
    %v58 = vld [vmem:[%s2] sm:$0x1]
    %v60 = vlaneseq
    %v61 = vshrl.u32 %v60, 7
    %v62 = vsub.s32 0, %v61
    %v63 = vrot.slane %v58, %v62
    %v81 = vunpack.c.l.b16 %v40
    %v82 = vunpack.c.l.b16 %v41
    %v83 = vunpack.c.l.b16 %v42
    %v84 = vunpack.c.l.b16 %v43
    %v85 = vunpack.c.l.b16 %v44
    %v86 = vunpack.c.l.b16 %v45
    %v87 = vunpack.c.l.b16 %v46
    %v88 = vunpack.c.l.b16 %v47
    %v89 = vunpack.c.l.b16 %v48
    %v90 = vunpack.c.l.b16 %v49
    %v91 = vunpack.c.l.b16 %v50
    %v92 = vunpack.c.l.b16 %v51
    %v93 = vunpack.c.l.b16 %v52
    %v94 = vunpack.c.l.b16 %v53
    %v95 = vunpack.c.l.b16 %v54
    %v96 = vunpack.c.l.b16 %v55
    %v97 = vpack.c.b16 %v82, %v81
    %v98 = vpack.c.b16 %v84, %v83
    %v99 = vpack.c.b16 %v86, %v85
    %v100 = vpack.c.b16 %v88, %v87
    %v101 = vpack.c.b16 %v90, %v89
    %v102 = vpack.c.b16 %v92, %v91
    %v103 = vpack.c.b16 %v94, %v93
    %v104 = vpack.c.b16 %v96, %v95
    %v107 = vunpack.c.l.b16 %v56
    %v108 = vunpack.c.l.b16 %v57
    %v109 = vpack.c.b16 %v108, %v107
    %vm111 = vcmask 130048
    %v113 = vsel %vm111, %v97, 0
    %v116 = vsel %vm111, %v98, 0
    %v119 = vsel %vm111, %v99, 0
    %v122 = vsel %vm111, %v100, 0
    %v125 = vsel %vm111, %v101, 0
    %v128 = vsel %vm111, %v102, 0
    %v131 = vsel %vm111, %v103, 0
    %v134 = vsel %vm111, %v104, 0
    %136 = vmatprep.subr.bf16.mxu0 0
    %137 = vmatpush1.bf16.msra.mxu0 %v109
    %138 = vmatprep.subr.bf16.mxu0 0
    %139 = vmatpush1.bf16.msra.mxu0 0
    %140 = vmatprep.subr.bf16.mxu0 0
    %141 = vmatpush1.bf16.msra.mxu0 0
    %142 = vmatprep.subr.bf16.mxu0 0
    %143 = vmatpush1.bf16.msra.mxu0 0
    %144 = vmatprep.subr.bf16.mxu0 0
    %145 = vmatpush1.bf16.msra.mxu0 0
    %146 = vmatprep.subr.bf16.mxu0 0
    %147 = vmatpush1.bf16.msra.mxu0 0
    %148 = vmatprep.subr.bf16.mxu0 0
    %149 = vmatpush1.bf16.msra.mxu0 0
    %150 = vmatprep.subr.bf16.mxu0 0
    %151 = vmatpush1.bf16.msra.mxu0 0
    %152 = vmatprep.subr.bf16.mxu0 0
    %153 = vmatpush1.bf16.msra.mxu0 0
    %154 = vmatprep.subr.bf16.mxu0 0
    %155 = vmatpush1.bf16.msra.mxu0 0
    %156 = vmatprep.subr.bf16.mxu0 0
    %157 = vmatpush1.bf16.msra.mxu0 0
    %158 = vmatprep.subr.bf16.mxu0 0
    %159 = vmatpush1.bf16.msra.mxu0 0
    %160 = vmatprep.subr.bf16.mxu0 0
    %161 = vmatpush1.bf16.msra.mxu0 0
    %162 = vmatprep.subr.bf16.mxu0 0
    %163 = vmatpush1.bf16.msra.mxu0 0
    %164 = vmatprep.subr.bf16.mxu0 0
    %165 = vmatpush1.bf16.msra.mxu0 0
    %166 = vmatprep.subr.bf16.mxu0 0
    %167 = vmatpush1.bf16.msra.mxu0 0
    %168 = vmatprep.mubr.bf16.mxu0 0
    %169 = vmatmul.mubr.bf16.gmra.mrb[0].mxu0 %v113
    %v170 = vpop.f32.mrb[0].mxu0
    %v171 = vadd.f32 %v63, %v170
    %v172 = vpop.f32.mrb[0].mxu0
    %v173 = vpop.f32.mrb[0].mxu0
    %v174 = vadd.f32 %v63, %v173
    %v175 = vpop.f32.mrb[0].mxu0
    %176 = vmatprep.mubr.bf16.mxu0 0
    %177 = vmatmul.mubr.bf16.gmra.mrb[0].mxu0 %v116
    %v178 = vpop.f32.mrb[0].mxu0
    %v179 = vadd.f32 %v63, %v178
    %v180 = vpop.f32.mrb[0].mxu0
    %v181 = vpop.f32.mrb[0].mxu0
    %v182 = vadd.f32 %v63, %v181
    %v183 = vpop.f32.mrb[0].mxu0
    %184 = vmatprep.mubr.bf16.mxu0 0
    %185 = vmatmul.mubr.bf16.gmra.mrb[0].mxu0 %v119
    %v186 = vpop.f32.mrb[0].mxu0
    %v187 = vadd.f32 %v63, %v186
    %v188 = vpop.f32.mrb[0].mxu0
    %v189 = vpop.f32.mrb[0].mxu0
    %v190 = vadd.f32 %v63, %v189
    %v191 = vpop.f32.mrb[0].mxu0
    %192 = vmatprep.mubr.bf16.mxu0 0
    %193 = vmatmul.mubr.bf16.gmra.mrb[0].mxu0 %v122
    %v194 = vpop.f32.mrb[0].mxu0
    %v195 = vadd.f32 %v63, %v194
    %v196 = vpop.f32.mrb[0].mxu0
    %v197 = vpop.f32.mrb[0].mxu0
    %v198 = vadd.f32 %v63, %v197
    %v199 = vpop.f32.mrb[0].mxu0
    %200 = vmatprep.mubr.bf16.mxu0 0
    %201 = vmatmul.mubr.bf16.gmra.mrb[0].mxu0 %v125
    %v202 = vpop.f32.mrb[0].mxu0
    %v203 = vadd.f32 %v63, %v202
    %v204 = vpop.f32.mrb[0].mxu0
    %v205 = vpop.f32.mrb[0].mxu0
    %v206 = vadd.f32 %v63, %v205
    %v207 = vpop.f32.mrb[0].mxu0
    %208 = vmatprep.mubr.bf16.mxu0 0
    %209 = vmatmul.mubr.bf16.gmra.mrb[0].mxu0 %v128
    %v210 = vpop.f32.mrb[0].mxu0
    %v211 = vadd.f32 %v63, %v210
    %v212 = vpop.f32.mrb[0].mxu0
    %v213 = vpop.f32.mrb[0].mxu0
    %v214 = vadd.f32 %v63, %v213
    %v215 = vpop.f32.mrb[0].mxu0
    %216 = vmatprep.mubr.bf16.mxu0 0
    %217 = vmatmul.mubr.bf16.gmra.mrb[0].mxu0 %v131
    %v218 = vpop.f32.mrb[0].mxu0
    %v219 = vadd.f32 %v63, %v218
    %v220 = vpop.f32.mrb[0].mxu0
    %v221 = vpop.f32.mrb[0].mxu0
    %v222 = vadd.f32 %v63, %v221
    %v223 = vpop.f32.mrb[0].mxu0
    %224 = vmatprep.mubr.bf16.mxu0 0
    %225 = vmatmul.mubr.bf16.gmra.mrb[0].mxu0 %v134
    %v226 = vpop.f32.mrb[0].mxu0
    %v227 = vadd.f32 %v63, %v226
    %v228 = vpop.f32.mrb[0].mxu0
    %v229 = vpop.f32.mrb[0].mxu0
    %v230 = vadd.f32 %v63, %v229
    %v231 = vpop.f32.mrb[0].mxu0
    %232 = vdwg.mxu0
    %v233 = vmax.f32 %v171, 0.0
    %v234 = vmax.f32 %v174, 0.0
    %v235 = vmax.f32 %v179, 0.0
    %v236 = vmax.f32 %v182, 0.0
    %v237 = vmax.f32 %v187, 0.0
    %v238 = vmax.f32 %v190, 0.0
    %v239 = vmax.f32 %v195, 0.0
    %v240 = vmax.f32 %v198, 0.0
    %v241 = vmax.f32 %v203, 0.0
    %v242 = vmax.f32 %v206, 0.0
    %v243 = vmax.f32 %v211, 0.0
    %v244 = vmax.f32 %v214, 0.0
    %v245 = vmax.f32 %v219, 0.0
    %v246 = vmax.f32 %v222, 0.0
    %v247 = vmax.f32 %v227, 0.0
    %v248 = vmax.f32 %v230, 0.0
    %v249 = vpack.c.bf16 %v234, %v233
    %v250 = vpack.c.bf16 %v236, %v235
    %v251 = vpack.c.bf16 %v238, %v237
    %v252 = vpack.c.bf16 %v240, %v239
    %v253 = vpack.c.bf16 %v242, %v241
    %v254 = vpack.c.bf16 %v244, %v243
    %v255 = vpack.c.bf16 %v246, %v245
    %v256 = vpack.c.bf16 %v248, %v247
    %v257 = vld [vmem:[%s4] sm:$0x1]
    %v259 = vlaneseq
    %v260 = vshrl.u32 %v259, 7
    %v261 = vsub.s32 0, %v260
    %v262 = vrot.slane %v257, %v261
    %v264 = vld [vmem:[%s3] sm:$0xf]
    %vm265 = vcmask 64512
    %v267 = vsel %vm265, %v249, 0
    %v270 = vsel %vm265, %v250, 0
    %vm272 = vcmask 1043456
    %v274 = vsel %vm272, %v264, 0
    %276 = vmatprep.subr.bf16.mxu0 0
    %277 = vmatpush1.bf16.msra.mxu0 %v274
    %278 = vmatprep.subr.bf16.mxu0 0
    %279 = vmatpush1.bf16.msra.mxu0 0
    %280 = vmatprep.subr.bf16.mxu0 0
    %281 = vmatpush1.bf16.msra.mxu0 0
    %282 = vmatprep.subr.bf16.mxu0 0
    %283 = vmatpush1.bf16.msra.mxu0 0
    %284 = vmatprep.subr.bf16.mxu0 0
    %285 = vmatpush1.bf16.msra.mxu0 0
    %286 = vmatprep.subr.bf16.mxu0 0
    %287 = vmatpush1.bf16.msra.mxu0 0
    %288 = vmatprep.subr.bf16.mxu0 0
    %289 = vmatpush1.bf16.msra.mxu0 0
    %290 = vmatprep.subr.bf16.mxu0 0
    %291 = vmatpush1.bf16.msra.mxu0 0
    %292 = vmatprep.subr.bf16.mxu0 0
    %293 = vmatpush1.bf16.msra.mxu0 0
    %294 = vmatprep.subr.bf16.mxu0 0
    %295 = vmatpush1.bf16.msra.mxu0 0
    %296 = vmatprep.subr.bf16.mxu0 0
    %297 = vmatpush1.bf16.msra.mxu0 0
    %298 = vmatprep.subr.bf16.mxu0 0
    %299 = vmatpush1.bf16.msra.mxu0 0
    %300 = vmatprep.subr.bf16.mxu0 0
    %301 = vmatpush1.bf16.msra.mxu0 0
    %302 = vmatprep.subr.bf16.mxu0 0
    %303 = vmatpush1.bf16.msra.mxu0 0
    %304 = vmatprep.subr.bf16.mxu0 0
    %305 = vmatpush1.bf16.msra.mxu0 0
    %306 = vmatprep.subr.bf16.mxu0 0
    %307 = vmatpush1.bf16.msra.mxu0 0
    %308 = vmatprep.mubr.bf16.mxu0 0
    %309 = vmatmul.mubr.bf16.gmra.mrb[0].mxu0 %v267
    %v310 = vpop.f32.mrb[0].mxu0
    %v311 = vadd.f32 0.0, %v310
    %v312 = vpop.f32.mrb[0].mxu0
    %v313 = vpop.f32.mrb[0].mxu0
    %v314 = vadd.f32 0.0, %v313
    %v315 = vpop.f32.mrb[0].mxu0
    %316 = vmatprep.mubr.bf16.mxu0 0
    %317 = vmatmul.mubr.bf16.gmra.mrb[0].mxu0 %v270
    %v318 = vpop.f32.mrb[0].mxu0
    %v319 = vadd.f32 0.0, %v318
    %v320 = vpop.f32.mrb[0].mxu0
    %v321 = vpop.f32.mrb[0].mxu0
    %v322 = vadd.f32 0.0, %v321
    %v323 = vpop.f32.mrb[0].mxu0
    %324 = vdwg.mxu0
    %v325 = vadd.f32 %v262, %v311
    %v326 = vadd.f32 %v262, %v314
    %v327 = vadd.f32 %v262, %v319
    %v328 = vadd.f32 %v262, %v322
    %v329 = vld [vmem:[%s3 + $0x4] sm:$0xf]
    %v331 = vsel %vm265, %v251, 0
    %v334 = vsel %vm265, %v252, 0
    %v337 = vsel %vm272, %v329, 0
    %339 = vmatprep.subr.bf16.mxu0 0
    %340 = vmatpush1.bf16.msra.mxu0 %v337
    %341 = vmatprep.subr.bf16.mxu0 0
    %342 = vmatpush1.bf16.msra.mxu0 0
    %343 = vmatprep.subr.bf16.mxu0 0
    %344 = vmatpush1.bf16.msra.mxu0 0
    %345 = vmatprep.subr.bf16.mxu0 0
    %346 = vmatpush1.bf16.msra.mxu0 0
    %347 = vmatprep.subr.bf16.mxu0 0
    %348 = vmatpush1.bf16.msra.mxu0 0
    %349 = vmatprep.subr.bf16.mxu0 0
    %350 = vmatpush1.bf16.msra.mxu0 0
    %351 = vmatprep.subr.bf16.mxu0 0
    %352 = vmatpush1.bf16.msra.mxu0 0
    %353 = vmatprep.subr.bf16.mxu0 0
    %354 = vmatpush1.bf16.msra.mxu0 0
    %355 = vmatprep.subr.bf16.mxu0 0
    %356 = vmatpush1.bf16.msra.mxu0 0
    %357 = vmatprep.subr.bf16.mxu0 0
    %358 = vmatpush1.bf16.msra.mxu0 0
    %359 = vmatprep.subr.bf16.mxu0 0
    %360 = vmatpush1.bf16.msra.mxu0 0
    %361 = vmatprep.subr.bf16.mxu0 0
    %362 = vmatpush1.bf16.msra.mxu0 0
    %363 = vmatprep.subr.bf16.mxu0 0
    %364 = vmatpush1.bf16.msra.mxu0 0
    %365 = vmatprep.subr.bf16.mxu0 0
    %366 = vmatpush1.bf16.msra.mxu0 0
    %367 = vmatprep.subr.bf16.mxu0 0
    %368 = vmatpush1.bf16.msra.mxu0 0
    %369 = vmatprep.subr.bf16.mxu0 0
    %370 = vmatpush1.bf16.msra.mxu0 0
    %371 = vmatprep.mubr.bf16.mxu0 0
    %372 = vmatmul.mubr.bf16.gmra.mrb[0].mxu0 %v331
    %v373 = vpop.f32.mrb[0].mxu0
    %v374 = vadd.f32 0.0, %v373
    %v375 = vpop.f32.mrb[0].mxu0
    %v376 = vpop.f32.mrb[0].mxu0
    %v377 = vadd.f32 0.0, %v376
    %v378 = vpop.f32.mrb[0].mxu0
    %379 = vmatprep.mubr.bf16.mxu0 0
    %380 = vmatmul.mubr.bf16.gmra.mrb[0].mxu0 %v334
    %v381 = vpop.f32.mrb[0].mxu0
    %v382 = vadd.f32 0.0, %v381
    %v383 = vpop.f32.mrb[0].mxu0
    %v384 = vpop.f32.mrb[0].mxu0
    %v385 = vadd.f32 0.0, %v384
    %v386 = vpop.f32.mrb[0].mxu0
    %387 = vdwg.mxu0
    %v388 = vadd.f32 %v325, %v374
    %v389 = vadd.f32 %v326, %v377
    %v390 = vadd.f32 %v327, %v382
    %v391 = vadd.f32 %v328, %v385
    %v392 = vld [vmem:[%s3 + $0x8] sm:$0xf]
    %v394 = vsel %vm265, %v253, 0
    %v397 = vsel %vm265, %v254, 0
    %v400 = vsel %vm272, %v392, 0
    %402 = vmatprep.subr.bf16.mxu0 0
    %403 = vmatpush1.bf16.msra.mxu0 %v400
    %404 = vmatprep.subr.bf16.mxu0 0
    %405 = vmatpush1.bf16.msra.mxu0 0
    %406 = vmatprep.subr.bf16.mxu0 0
    %407 = vmatpush1.bf16.msra.mxu0 0
    %408 = vmatprep.subr.bf16.mxu0 0
    %409 = vmatpush1.bf16.msra.mxu0 0
    %410 = vmatprep.subr.bf16.mxu0 0
    %411 = vmatpush1.bf16.msra.mxu0 0
    %412 = vmatprep.subr.bf16.mxu0 0
    %413 = vmatpush1.bf16.msra.mxu0 0
    %414 = vmatprep.subr.bf16.mxu0 0
    %415 = vmatpush1.bf16.msra.mxu0 0
    %416 = vmatprep.subr.bf16.mxu0 0
    %417 = vmatpush1.bf16.msra.mxu0 0
    %418 = vmatprep.subr.bf16.mxu0 0
    %419 = vmatpush1.bf16.msra.mxu0 0
    %420 = vmatprep.subr.bf16.mxu0 0
    %421 = vmatpush1.bf16.msra.mxu0 0
    %422 = vmatprep.subr.bf16.mxu0 0
    %423 = vmatpush1.bf16.msra.mxu0 0
    %424 = vmatprep.subr.bf16.mxu0 0
    %425 = vmatpush1.bf16.msra.mxu0 0
    %426 = vmatprep.subr.bf16.mxu0 0
    %427 = vmatpush1.bf16.msra.mxu0 0
    %428 = vmatprep.subr.bf16.mxu0 0
    %429 = vmatpush1.bf16.msra.mxu0 0
    %430 = vmatprep.subr.bf16.mxu0 0
    %431 = vmatpush1.bf16.msra.mxu0 0
    %432 = vmatprep.subr.bf16.mxu0 0
    %433 = vmatpush1.bf16.msra.mxu0 0
    %434 = vmatprep.mubr.bf16.mxu0 0
    %435 = vmatmul.mubr.bf16.gmra.mrb[0].mxu0 %v394
    %v436 = vpop.f32.mrb[0].mxu0
    %v437 = vadd.f32 0.0, %v436
    %v438 = vpop.f32.mrb[0].mxu0
    %v439 = vpop.f32.mrb[0].mxu0
    %v440 = vadd.f32 0.0, %v439
    %v441 = vpop.f32.mrb[0].mxu0
    %442 = vmatprep.mubr.bf16.mxu0 0
    %443 = vmatmul.mubr.bf16.gmra.mrb[0].mxu0 %v397
    %v444 = vpop.f32.mrb[0].mxu0
    %v445 = vadd.f32 0.0, %v444
    %v446 = vpop.f32.mrb[0].mxu0
    %v447 = vpop.f32.mrb[0].mxu0
    %v448 = vadd.f32 0.0, %v447
    %v449 = vpop.f32.mrb[0].mxu0
    %450 = vdwg.mxu0
    %v451 = vadd.f32 %v388, %v437
    %v452 = vadd.f32 %v389, %v440
    %v453 = vadd.f32 %v390, %v445
    %v454 = vadd.f32 %v391, %v448
    %v455 = vld [vmem:[%s3 + $0xc] sm:$0xf]
    %v457 = vsel %vm265, %v255, 0
    %v460 = vsel %vm265, %v256, 0
    %v463 = vsel %vm272, %v455, 0
    %465 = vmatprep.subr.bf16.mxu0 0
    %466 = vmatpush1.bf16.msra.mxu0 %v463
    %467 = vmatprep.subr.bf16.mxu0 0
    %468 = vmatpush1.bf16.msra.mxu0 0
    %469 = vmatprep.subr.bf16.mxu0 0
    %470 = vmatpush1.bf16.msra.mxu0 0
    %471 = vmatprep.subr.bf16.mxu0 0
    %472 = vmatpush1.bf16.msra.mxu0 0
    %473 = vmatprep.subr.bf16.mxu0 0
    %474 = vmatpush1.bf16.msra.mxu0 0
    %475 = vmatprep.subr.bf16.mxu0 0
    %476 = vmatpush1.bf16.msra.mxu0 0
    %477 = vmatprep.subr.bf16.mxu0 0
    %478 = vmatpush1.bf16.msra.mxu0 0
    %479 = vmatprep.subr.bf16.mxu0 0
    %480 = vmatpush1.bf16.msra.mxu0 0
    %481 = vmatprep.subr.bf16.mxu0 0
    %482 = vmatpush1.bf16.msra.mxu0 0
    %483 = vmatprep.subr.bf16.mxu0 0
    %484 = vmatpush1.bf16.msra.mxu0 0
    %485 = vmatprep.subr.bf16.mxu0 0
    %486 = vmatpush1.bf16.msra.mxu0 0
    %487 = vmatprep.subr.bf16.mxu0 0
    %488 = vmatpush1.bf16.msra.mxu0 0
    %489 = vmatprep.subr.bf16.mxu0 0
    %490 = vmatpush1.bf16.msra.mxu0 0
    %491 = vmatprep.subr.bf16.mxu0 0
    %492 = vmatpush1.bf16.msra.mxu0 0
    %493 = vmatprep.subr.bf16.mxu0 0
    %494 = vmatpush1.bf16.msra.mxu0 0
    %495 = vmatprep.subr.bf16.mxu0 0
    %496 = vmatpush1.bf16.msra.mxu0 0
    %497 = vmatprep.mubr.bf16.mxu0 0
    %498 = vmatmul.mubr.bf16.gmra.mrb[0].mxu0 %v457
    %v499 = vpop.f32.mrb[0].mxu0
    %v500 = vadd.f32 0.0, %v499
    %v501 = vpop.f32.mrb[0].mxu0
    %v502 = vpop.f32.mrb[0].mxu0
    %v503 = vadd.f32 0.0, %v502
    %v504 = vpop.f32.mrb[0].mxu0
    %505 = vmatprep.mubr.bf16.mxu0 0
    %506 = vmatmul.mubr.bf16.gmra.mrb[0].mxu0 %v460
    %v507 = vpop.f32.mrb[0].mxu0
    %v508 = vadd.f32 0.0, %v507
    %v509 = vpop.f32.mrb[0].mxu0
    %v510 = vpop.f32.mrb[0].mxu0
    %v511 = vadd.f32 0.0, %v510
    %v512 = vpop.f32.mrb[0].mxu0
    %513 = vdwg.mxu0
    %v514 = vadd.f32 %v451, %v500
    %v515 = vadd.f32 %v452, %v503
    %v516 = vadd.f32 %v453, %v508
    %v517 = vadd.f32 %v454, %v511
    %v518 = vmax.f32 %v514, 0.0
    %v519 = vmax.f32 %v515, 0.0
    %v520 = vmax.f32 %v516, 0.0
    %v521 = vmax.f32 %v517, 0.0
    %v522 = vpack.c.bf16 %v519, %v518
    %v523 = vpack.c.bf16 %v521, %v520
    %v524 = vld [vmem:[%s6] sm:$0x1]
    %v526 = vlaneseq
    %v527 = vshrl.u32 %v526, 7
    %v528 = vsub.s32 0, %v527
    %v529 = vrot.slane %v524, %v528
    %v531 = vld [vmem:[%s5] sm:$0xf]
    %v533 = vsel %vm265, %v522, 0
    %v536 = vsel %vm272, %v531, 0
    %538 = vmatprep.subr.bf16.mxu0 0
    %539 = vmatpush1.bf16.msra.mxu0 %v536
    %540 = vmatprep.subr.bf16.mxu0 0
    %541 = vmatpush1.bf16.msra.mxu0 0
    %542 = vmatprep.subr.bf16.mxu0 0
    %543 = vmatpush1.bf16.msra.mxu0 0
    %544 = vmatprep.subr.bf16.mxu0 0
    %545 = vmatpush1.bf16.msra.mxu0 0
    %546 = vmatprep.subr.bf16.mxu0 0
    %547 = vmatpush1.bf16.msra.mxu0 0
    %548 = vmatprep.subr.bf16.mxu0 0
    %549 = vmatpush1.bf16.msra.mxu0 0
    %550 = vmatprep.subr.bf16.mxu0 0
    %551 = vmatpush1.bf16.msra.mxu0 0
    %552 = vmatprep.subr.bf16.mxu0 0
    %553 = vmatpush1.bf16.msra.mxu0 0
    %554 = vmatprep.subr.bf16.mxu0 0
    %555 = vmatpush1.bf16.msra.mxu0 0
    %556 = vmatprep.subr.bf16.mxu0 0
    %557 = vmatpush1.bf16.msra.mxu0 0
    %558 = vmatprep.subr.bf16.mxu0 0
    %559 = vmatpush1.bf16.msra.mxu0 0
    %560 = vmatprep.subr.bf16.mxu0 0
    %561 = vmatpush1.bf16.msra.mxu0 0
    %562 = vmatprep.subr.bf16.mxu0 0
    %563 = vmatpush1.bf16.msra.mxu0 0
    %564 = vmatprep.subr.bf16.mxu0 0
    %565 = vmatpush1.bf16.msra.mxu0 0
    %566 = vmatprep.subr.bf16.mxu0 0
    %567 = vmatpush1.bf16.msra.mxu0 0
    %568 = vmatprep.subr.bf16.mxu0 0
    %569 = vmatpush1.bf16.msra.mxu0 0
    %570 = vmatprep.mubr.bf16.mxu0 0
    %571 = vmatmul.mubr.bf16.gmra.mrb[0].mxu0 %v533
    %v572 = vpop.f32.mrb[0].mxu0
    %v573 = vadd.f32 0.0, %v572
    %v574 = vpop.f32.mrb[0].mxu0
    %v575 = vpop.f32.mrb[0].mxu0
    %v576 = vpop.f32.mrb[0].mxu0
    %577 = vdwg.mxu0
    %v578 = vadd.f32 %v529, %v573
    %v579 = vld [vmem:[%s5 + $0x4] sm:$0xf]
    %v581 = vrot.slane %v522, 4
    %v583 = vsel %vm265, %v581, 0
    %v586 = vsel %vm272, %v579, 0
    %588 = vmatprep.subr.bf16.mxu0 0
    %589 = vmatpush1.bf16.msra.mxu0 %v586
    %590 = vmatprep.subr.bf16.mxu0 0
    %591 = vmatpush1.bf16.msra.mxu0 0
    %592 = vmatprep.subr.bf16.mxu0 0
    %593 = vmatpush1.bf16.msra.mxu0 0
    %594 = vmatprep.subr.bf16.mxu0 0
    %595 = vmatpush1.bf16.msra.mxu0 0
    %596 = vmatprep.subr.bf16.mxu0 0
    %597 = vmatpush1.bf16.msra.mxu0 0
    %598 = vmatprep.subr.bf16.mxu0 0
    %599 = vmatpush1.bf16.msra.mxu0 0
    %600 = vmatprep.subr.bf16.mxu0 0
    %601 = vmatpush1.bf16.msra.mxu0 0
    %602 = vmatprep.subr.bf16.mxu0 0
    %603 = vmatpush1.bf16.msra.mxu0 0
    %604 = vmatprep.subr.bf16.mxu0 0
    %605 = vmatpush1.bf16.msra.mxu0 0
    %606 = vmatprep.subr.bf16.mxu0 0
    %607 = vmatpush1.bf16.msra.mxu0 0
    %608 = vmatprep.subr.bf16.mxu0 0
    %609 = vmatpush1.bf16.msra.mxu0 0
    %610 = vmatprep.subr.bf16.mxu0 0
    %611 = vmatpush1.bf16.msra.mxu0 0
    %612 = vmatprep.subr.bf16.mxu0 0
    %613 = vmatpush1.bf16.msra.mxu0 0
    %614 = vmatprep.subr.bf16.mxu0 0
    %615 = vmatpush1.bf16.msra.mxu0 0
    %616 = vmatprep.subr.bf16.mxu0 0
    %617 = vmatpush1.bf16.msra.mxu0 0
    %618 = vmatprep.subr.bf16.mxu0 0
    %619 = vmatpush1.bf16.msra.mxu0 0
    %620 = vmatprep.mubr.bf16.mxu0 0
    %621 = vmatmul.mubr.bf16.gmra.mrb[0].mxu0 %v583
    %v622 = vpop.f32.mrb[0].mxu0
    %v623 = vadd.f32 0.0, %v622
    %v624 = vpop.f32.mrb[0].mxu0
    %v625 = vpop.f32.mrb[0].mxu0
    %v626 = vpop.f32.mrb[0].mxu0
    %627 = vdwg.mxu0
    %v628 = vadd.f32 %v578, %v623
    %v629 = vld [vmem:[%s5 + $0x8] sm:$0xf]
    %v631 = vsel %vm265, %v523, 0
    %v634 = vsel %vm272, %v629, 0
    %636 = vmatprep.subr.bf16.mxu0 0
    %637 = vmatpush1.bf16.msra.mxu0 %v634
    %638 = vmatprep.subr.bf16.mxu0 0
    %639 = vmatpush1.bf16.msra.mxu0 0
    %640 = vmatprep.subr.bf16.mxu0 0
    %641 = vmatpush1.bf16.msra.mxu0 0
    %642 = vmatprep.subr.bf16.mxu0 0
    %643 = vmatpush1.bf16.msra.mxu0 0
    %644 = vmatprep.subr.bf16.mxu0 0
    %645 = vmatpush1.bf16.msra.mxu0 0
    %646 = vmatprep.subr.bf16.mxu0 0
    %647 = vmatpush1.bf16.msra.mxu0 0
    %648 = vmatprep.subr.bf16.mxu0 0
    %649 = vmatpush1.bf16.msra.mxu0 0
    %650 = vmatprep.subr.bf16.mxu0 0
    %651 = vmatpush1.bf16.msra.mxu0 0
    %652 = vmatprep.subr.bf16.mxu0 0
    %653 = vmatpush1.bf16.msra.mxu0 0
    %654 = vmatprep.subr.bf16.mxu0 0
    %655 = vmatpush1.bf16.msra.mxu0 0
    %656 = vmatprep.subr.bf16.mxu0 0
    %657 = vmatpush1.bf16.msra.mxu0 0
    %658 = vmatprep.subr.bf16.mxu0 0
    %659 = vmatpush1.bf16.msra.mxu0 0
    %660 = vmatprep.subr.bf16.mxu0 0
    %661 = vmatpush1.bf16.msra.mxu0 0
    %662 = vmatprep.subr.bf16.mxu0 0
    %663 = vmatpush1.bf16.msra.mxu0 0
    %664 = vmatprep.subr.bf16.mxu0 0
    %665 = vmatpush1.bf16.msra.mxu0 0
    %666 = vmatprep.subr.bf16.mxu0 0
    %667 = vmatpush1.bf16.msra.mxu0 0
    %668 = vmatprep.mubr.bf16.mxu0 0
    %669 = vmatmul.mubr.bf16.gmra.mrb[0].mxu0 %v631
    %v670 = vpop.f32.mrb[0].mxu0
    %v671 = vadd.f32 0.0, %v670
    %v672 = vpop.f32.mrb[0].mxu0
    %v673 = vpop.f32.mrb[0].mxu0
    %v674 = vpop.f32.mrb[0].mxu0
    %675 = vdwg.mxu0
    %v676 = vadd.f32 %v628, %v671
    %v677 = vld [vmem:[%s5 + $0xc] sm:$0xf]
    %v679 = vrot.slane %v523, 4
    %v681 = vsel %vm265, %v679, 0
    %v684 = vsel %vm272, %v677, 0
    %686 = vmatprep.subr.bf16.mxu0 0
    %687 = vmatpush1.bf16.msra.mxu0 %v684
    %688 = vmatprep.subr.bf16.mxu0 0
    %689 = vmatpush1.bf16.msra.mxu0 0
    %690 = vmatprep.subr.bf16.mxu0 0
    %691 = vmatpush1.bf16.msra.mxu0 0
    %692 = vmatprep.subr.bf16.mxu0 0
    %693 = vmatpush1.bf16.msra.mxu0 0
    %694 = vmatprep.subr.bf16.mxu0 0
    %695 = vmatpush1.bf16.msra.mxu0 0
    %696 = vmatprep.subr.bf16.mxu0 0
    %697 = vmatpush1.bf16.msra.mxu0 0
    %698 = vmatprep.subr.bf16.mxu0 0
    %699 = vmatpush1.bf16.msra.mxu0 0
    %700 = vmatprep.subr.bf16.mxu0 0
    %701 = vmatpush1.bf16.msra.mxu0 0
    %702 = vmatprep.subr.bf16.mxu0 0
    %703 = vmatpush1.bf16.msra.mxu0 0
    %704 = vmatprep.subr.bf16.mxu0 0
    %705 = vmatpush1.bf16.msra.mxu0 0
    %706 = vmatprep.subr.bf16.mxu0 0
    %707 = vmatpush1.bf16.msra.mxu0 0
    %708 = vmatprep.subr.bf16.mxu0 0
    %709 = vmatpush1.bf16.msra.mxu0 0
    %710 = vmatprep.subr.bf16.mxu0 0
    %711 = vmatpush1.bf16.msra.mxu0 0
    %712 = vmatprep.subr.bf16.mxu0 0
    %713 = vmatpush1.bf16.msra.mxu0 0
    %714 = vmatprep.subr.bf16.mxu0 0
    %715 = vmatpush1.bf16.msra.mxu0 0
    %716 = vmatprep.subr.bf16.mxu0 0
    %717 = vmatpush1.bf16.msra.mxu0 0
    %718 = vmatprep.mubr.bf16.mxu0 0
    %719 = vmatmul.mubr.bf16.gmra.mrb[0].mxu0 %v681
    %v720 = vpop.f32.mrb[0].mxu0
    %v721 = vadd.f32 0.0, %v720
    %v722 = vpop.f32.mrb[0].mxu0
    %v723 = vpop.f32.mrb[0].mxu0
    %v724 = vpop.f32.mrb[0].mxu0
    %725 = vdwg.mxu0
    %v726 = vadd.f32 %v676, %v721
    %v727 = vmax.f32 %v726, 0.0
    %v728 = vpack.c.bf16 %v727, %v727
    %v729 = vld [vmem:[%s8] sm:$0xf]
    %v731 = vlaneseq
    %v732 = vshrl.u32 %v731, 7
    %v733 = vsub.s32 0, %v732
    %v734 = vrot.slane %v729, %v733
    %v735 = vlaneseq
    %v736 = vshrl.u32 %v735, 7
    %v737 = vsub.s32 1, %v736
    %v738 = vrot.slane %v729, %v737
    %v739 = vlaneseq
    %v740 = vshrl.u32 %v739, 7
    %v741 = vsub.s32 2, %v740
    %v742 = vrot.slane %v729, %v741
    %v743 = vlaneseq
    %v744 = vshrl.u32 %v743, 7
    %v745 = vsub.s32 3, %v744
    %v746 = vrot.slane %v729, %v745
    %v751 = vld [vmem:[%s7] sm:$0xff]
    %v752 = vld [vmem:[%s7 + $0x8] sm:$0xff]
    %v755 = vunpack.c.l.b16 %v751
    %v756 = vunpack.c.h.b16 %v751
    %v757 = vunpack.c.l.b16 %v752
    %v758 = vunpack.c.h.b16 %v752
    %v759 = vpack.c.b16 %v755, %v755
    %v760 = vpack.c.b16 %v756, %v756
    %v761 = vpack.c.b16 %v757, %v757
    %v762 = vpack.c.b16 %v758, %v758
    %v764 = vsel %vm265, %v728, 0
    %v767 = vsel %vm272, %v759, 0
    %v770 = vsel %vm272, %v760, 0
    %v773 = vsel %vm272, %v761, 0
    %v776 = vsel %vm272, %v762, 0
    %778 = vmatprep.subr.bf16.mxu0 %v770
    %779 = vmatpush1.bf16.msra.mxu0 %v767
    %780 = vmatprep.subr.bf16.mxu0 0
    %781 = vmatpush1.bf16.msra.mxu0 0
    %782 = vmatprep.subr.bf16.mxu0 0
    %783 = vmatpush1.bf16.msra.mxu0 0
    %784 = vmatprep.subr.bf16.mxu0 0
    %785 = vmatpush1.bf16.msra.mxu0 0
    %786 = vmatprep.subr.bf16.mxu0 0
    %787 = vmatpush1.bf16.msra.mxu0 0
    %788 = vmatprep.subr.bf16.mxu0 0
    %789 = vmatpush1.bf16.msra.mxu0 0
    %790 = vmatprep.subr.bf16.mxu0 0
    %791 = vmatpush1.bf16.msra.mxu0 0
    %792 = vmatprep.subr.bf16.mxu0 0
    %793 = vmatpush1.bf16.msra.mxu0 0
    %794 = vmatprep.subr.bf16.mxu0 0
    %795 = vmatpush1.bf16.msra.mxu0 0
    %796 = vmatprep.subr.bf16.mxu0 0
    %797 = vmatpush1.bf16.msra.mxu0 0
    %798 = vmatprep.subr.bf16.mxu0 0
    %799 = vmatpush1.bf16.msra.mxu0 0
    %800 = vmatprep.subr.bf16.mxu0 0
    %801 = vmatpush1.bf16.msra.mxu0 0
    %802 = vmatprep.subr.bf16.mxu0 0
    %803 = vmatpush1.bf16.msra.mxu0 0
    %804 = vmatprep.subr.bf16.mxu0 0
    %805 = vmatpush1.bf16.msra.mxu0 0
    %806 = vmatprep.subr.bf16.mxu0 0
    %807 = vmatpush1.bf16.msra.mxu0 0
    %808 = vmatprep.subr.bf16.mxu0 0
    %809 = vmatpush1.bf16.msra.mxu0 0
    %810 = vmatprep.mubr.bf16.mxu0 0
    %811 = vmatmul.mubr.bf16.gmra.mrb[0].mxu0 %v764
    %v812 = vpop.f32.mrb[0].mxu0
    %v813 = vadd.f32 0.0, %v812
    %v814 = vpop.f32.mrb[0].mxu0
    %v815 = vadd.f32 0.0, %v814
    %v816 = vpop.f32.mrb[0].mxu0
    %v817 = vpop.f32.mrb[0].mxu0
    %818 = vdwg.mxu0
    %819 = vmatprep.subr.bf16.mxu0 %v776
    %820 = vmatpush1.bf16.msra.mxu0 %v773
    %821 = vmatprep.subr.bf16.mxu0 0
    %822 = vmatpush1.bf16.msra.mxu0 0
    %823 = vmatprep.subr.bf16.mxu0 0
    %824 = vmatpush1.bf16.msra.mxu0 0
    %825 = vmatprep.subr.bf16.mxu0 0
    %826 = vmatpush1.bf16.msra.mxu0 0
    %827 = vmatprep.subr.bf16.mxu0 0
    %828 = vmatpush1.bf16.msra.mxu0 0
    %829 = vmatprep.subr.bf16.mxu0 0
    %830 = vmatpush1.bf16.msra.mxu0 0
    %831 = vmatprep.subr.bf16.mxu0 0
    %832 = vmatpush1.bf16.msra.mxu0 0
    %833 = vmatprep.subr.bf16.mxu0 0
    %834 = vmatpush1.bf16.msra.mxu0 0
    %835 = vmatprep.subr.bf16.mxu0 0
    %836 = vmatpush1.bf16.msra.mxu0 0
    %837 = vmatprep.subr.bf16.mxu0 0
    %838 = vmatpush1.bf16.msra.mxu0 0
    %839 = vmatprep.subr.bf16.mxu0 0
    %840 = vmatpush1.bf16.msra.mxu0 0
    %841 = vmatprep.subr.bf16.mxu0 0
    %842 = vmatpush1.bf16.msra.mxu0 0
    %843 = vmatprep.subr.bf16.mxu0 0
    %844 = vmatpush1.bf16.msra.mxu0 0
    %845 = vmatprep.subr.bf16.mxu0 0
    %846 = vmatpush1.bf16.msra.mxu0 0
    %847 = vmatprep.subr.bf16.mxu0 0
    %848 = vmatpush1.bf16.msra.mxu0 0
    %849 = vmatprep.subr.bf16.mxu0 0
    %850 = vmatpush1.bf16.msra.mxu0 0
    %851 = vmatprep.mubr.bf16.mxu0 0
    %852 = vmatmul.mubr.bf16.gmra.mrb[0].mxu0 %v764
    %v853 = vpop.f32.mrb[0].mxu0
    %v854 = vadd.f32 0.0, %v853
    %v855 = vpop.f32.mrb[0].mxu0
    %v856 = vadd.f32 0.0, %v855
    %v857 = vpop.f32.mrb[0].mxu0
    %v858 = vpop.f32.mrb[0].mxu0
    %859 = vdwg.mxu0
    %v860 = vadd.f32 %v734, %v813
    %v861 = vadd.f32 %v738, %v815
    %v862 = vadd.f32 %v742, %v854
    %v863 = vadd.f32 %v746, %v856
    %v864 = vld [vmem:[%s7 + $0x10] sm:$0xff]
    %v865 = vld [vmem:[%s7 + $0x18] sm:$0xff]
    %v867 = vrot.slane %v728, 1
    %v870 = vunpack.c.l.b16 %v864
    %v871 = vunpack.c.h.b16 %v864
    %v872 = vunpack.c.l.b16 %v865
    %v873 = vunpack.c.h.b16 %v865
    %v874 = vpack.c.b16 %v870, %v870
    %v875 = vpack.c.b16 %v871, %v871
    %v876 = vpack.c.b16 %v872, %v872
    %v877 = vpack.c.b16 %v873, %v873
    %v879 = vsel %vm265, %v867, 0
    %v882 = vsel %vm272, %v874, 0
    %v885 = vsel %vm272, %v875, 0
    %v888 = vsel %vm272, %v876, 0
    %v891 = vsel %vm272, %v877, 0
    %893 = vmatprep.subr.bf16.mxu0 %v885
    %894 = vmatpush1.bf16.msra.mxu0 %v882
    %895 = vmatprep.subr.bf16.mxu0 0
    %896 = vmatpush1.bf16.msra.mxu0 0
    %897 = vmatprep.subr.bf16.mxu0 0
    %898 = vmatpush1.bf16.msra.mxu0 0
    %899 = vmatprep.subr.bf16.mxu0 0
    %900 = vmatpush1.bf16.msra.mxu0 0
    %901 = vmatprep.subr.bf16.mxu0 0
    %902 = vmatpush1.bf16.msra.mxu0 0
    %903 = vmatprep.subr.bf16.mxu0 0
    %904 = vmatpush1.bf16.msra.mxu0 0
    %905 = vmatprep.subr.bf16.mxu0 0
    %906 = vmatpush1.bf16.msra.mxu0 0
    %907 = vmatprep.subr.bf16.mxu0 0
    %908 = vmatpush1.bf16.msra.mxu0 0
    %909 = vmatprep.subr.bf16.mxu0 0
    %910 = vmatpush1.bf16.msra.mxu0 0
    %911 = vmatprep.subr.bf16.mxu0 0
    %912 = vmatpush1.bf16.msra.mxu0 0
    %913 = vmatprep.subr.bf16.mxu0 0
    %914 = vmatpush1.bf16.msra.mxu0 0
    %915 = vmatprep.subr.bf16.mxu0 0
    %916 = vmatpush1.bf16.msra.mxu0 0
    %917 = vmatprep.subr.bf16.mxu0 0
    %918 = vmatpush1.bf16.msra.mxu0 0
    %919 = vmatprep.subr.bf16.mxu0 0
    %920 = vmatpush1.bf16.msra.mxu0 0
    %921 = vmatprep.subr.bf16.mxu0 0
    %922 = vmatpush1.bf16.msra.mxu0 0
    %923 = vmatprep.subr.bf16.mxu0 0
    %924 = vmatpush1.bf16.msra.mxu0 0
    %925 = vmatprep.mubr.bf16.mxu0 0
    %926 = vmatmul.mubr.bf16.gmra.mrb[0].mxu0 %v879
    %v927 = vpop.f32.mrb[0].mxu0
    %v928 = vadd.f32 0.0, %v927
    %v929 = vpop.f32.mrb[0].mxu0
    %v930 = vadd.f32 0.0, %v929
    %v931 = vpop.f32.mrb[0].mxu0
    %v932 = vpop.f32.mrb[0].mxu0
    %933 = vdwg.mxu0
    %934 = vmatprep.subr.bf16.mxu0 %v891
    %935 = vmatpush1.bf16.msra.mxu0 %v888
    %936 = vmatprep.subr.bf16.mxu0 0
    %937 = vmatpush1.bf16.msra.mxu0 0
    %938 = vmatprep.subr.bf16.mxu0 0
    %939 = vmatpush1.bf16.msra.mxu0 0
    %940 = vmatprep.subr.bf16.mxu0 0
    %941 = vmatpush1.bf16.msra.mxu0 0
    %942 = vmatprep.subr.bf16.mxu0 0
    %943 = vmatpush1.bf16.msra.mxu0 0
    %944 = vmatprep.subr.bf16.mxu0 0
    %945 = vmatpush1.bf16.msra.mxu0 0
    %946 = vmatprep.subr.bf16.mxu0 0
    %947 = vmatpush1.bf16.msra.mxu0 0
    %948 = vmatprep.subr.bf16.mxu0 0
    %949 = vmatpush1.bf16.msra.mxu0 0
    %950 = vmatprep.subr.bf16.mxu0 0
    %951 = vmatpush1.bf16.msra.mxu0 0
    %952 = vmatprep.subr.bf16.mxu0 0
    %953 = vmatpush1.bf16.msra.mxu0 0
    %954 = vmatprep.subr.bf16.mxu0 0
    %955 = vmatpush1.bf16.msra.mxu0 0
    %956 = vmatprep.subr.bf16.mxu0 0
    %957 = vmatpush1.bf16.msra.mxu0 0
    %958 = vmatprep.subr.bf16.mxu0 0
    %959 = vmatpush1.bf16.msra.mxu0 0
    %960 = vmatprep.subr.bf16.mxu0 0
    %961 = vmatpush1.bf16.msra.mxu0 0
    %962 = vmatprep.subr.bf16.mxu0 0
    %963 = vmatpush1.bf16.msra.mxu0 0
    %964 = vmatprep.subr.bf16.mxu0 0
    %965 = vmatpush1.bf16.msra.mxu0 0
    %966 = vmatprep.mubr.bf16.mxu0 0
    %967 = vmatmul.mubr.bf16.gmra.mrb[0].mxu0 %v879
    %v968 = vpop.f32.mrb[0].mxu0
    %v969 = vadd.f32 0.0, %v968
    %v970 = vpop.f32.mrb[0].mxu0
    %v971 = vadd.f32 0.0, %v970
    %v972 = vpop.f32.mrb[0].mxu0
    %v973 = vpop.f32.mrb[0].mxu0
    %974 = vdwg.mxu0
    %v975 = vadd.f32 %v860, %v928
    %v976 = vadd.f32 %v861, %v930
    %v977 = vadd.f32 %v862, %v969
    %v978 = vadd.f32 %v863, %v971
    %v979 = vld [vmem:[%s7 + $0x20] sm:$0xff]
    %v980 = vld [vmem:[%s7 + $0x28] sm:$0xff]
    %v981 = vrot.slane %v728, 2
    %v984 = vunpack.c.l.b16 %v979
    %v985 = vunpack.c.h.b16 %v979
    %v986 = vunpack.c.l.b16 %v980
    %v987 = vunpack.c.h.b16 %v980
    %v988 = vpack.c.b16 %v984, %v984
    %v989 = vpack.c.b16 %v985, %v985
    %v990 = vpack.c.b16 %v986, %v986
    %v991 = vpack.c.b16 %v987, %v987
    %v993 = vsel %vm265, %v981, 0
    %v996 = vsel %vm272, %v988, 0
    %v999 = vsel %vm272, %v989, 0
    %v1002 = vsel %vm272, %v990, 0
    %v1005 = vsel %vm272, %v991, 0
    %1007 = vmatprep.subr.bf16.mxu0 %v999
    %1008 = vmatpush1.bf16.msra.mxu0 %v996
    %1009 = vmatprep.subr.bf16.mxu0 0
    %1010 = vmatpush1.bf16.msra.mxu0 0
    %1011 = vmatprep.subr.bf16.mxu0 0
    %1012 = vmatpush1.bf16.msra.mxu0 0
    %1013 = vmatprep.subr.bf16.mxu0 0
    %1014 = vmatpush1.bf16.msra.mxu0 0
    %1015 = vmatprep.subr.bf16.mxu0 0
    %1016 = vmatpush1.bf16.msra.mxu0 0
    %1017 = vmatprep.subr.bf16.mxu0 0
    %1018 = vmatpush1.bf16.msra.mxu0 0
    %1019 = vmatprep.subr.bf16.mxu0 0
    %1020 = vmatpush1.bf16.msra.mxu0 0
    %1021 = vmatprep.subr.bf16.mxu0 0
    %1022 = vmatpush1.bf16.msra.mxu0 0
    %1023 = vmatprep.subr.bf16.mxu0 0
    %1024 = vmatpush1.bf16.msra.mxu0 0
    %1025 = vmatprep.subr.bf16.mxu0 0
    %1026 = vmatpush1.bf16.msra.mxu0 0
    %1027 = vmatprep.subr.bf16.mxu0 0
    %1028 = vmatpush1.bf16.msra.mxu0 0
    %1029 = vmatprep.subr.bf16.mxu0 0
    %1030 = vmatpush1.bf16.msra.mxu0 0
    %1031 = vmatprep.subr.bf16.mxu0 0
    %1032 = vmatpush1.bf16.msra.mxu0 0
    %1033 = vmatprep.subr.bf16.mxu0 0
    %1034 = vmatpush1.bf16.msra.mxu0 0
    %1035 = vmatprep.subr.bf16.mxu0 0
    %1036 = vmatpush1.bf16.msra.mxu0 0
    %1037 = vmatprep.subr.bf16.mxu0 0
    %1038 = vmatpush1.bf16.msra.mxu0 0
    %1039 = vmatprep.mubr.bf16.mxu0 0
    %1040 = vmatmul.mubr.bf16.gmra.mrb[0].mxu0 %v993
    %v1041 = vpop.f32.mrb[0].mxu0
    %v1042 = vadd.f32 0.0, %v1041
    %v1043 = vpop.f32.mrb[0].mxu0
    %v1044 = vadd.f32 0.0, %v1043
    %v1045 = vpop.f32.mrb[0].mxu0
    %v1046 = vpop.f32.mrb[0].mxu0
    %1047 = vdwg.mxu0
    %1048 = vmatprep.subr.bf16.mxu0 %v1005
    %1049 = vmatpush1.bf16.msra.mxu0 %v1002
    %1050 = vmatprep.subr.bf16.mxu0 0
    %1051 = vmatpush1.bf16.msra.mxu0 0
    %1052 = vmatprep.subr.bf16.mxu0 0
    %1053 = vmatpush1.bf16.msra.mxu0 0
    %1054 = vmatprep.subr.bf16.mxu0 0
    %1055 = vmatpush1.bf16.msra.mxu0 0
    %1056 = vmatprep.subr.bf16.mxu0 0
    %1057 = vmatpush1.bf16.msra.mxu0 0
    %1058 = vmatprep.subr.bf16.mxu0 0
    %1059 = vmatpush1.bf16.msra.mxu0 0
    %1060 = vmatprep.subr.bf16.mxu0 0
    %1061 = vmatpush1.bf16.msra.mxu0 0
    %1062 = vmatprep.subr.bf16.mxu0 0
    %1063 = vmatpush1.bf16.msra.mxu0 0
    %1064 = vmatprep.subr.bf16.mxu0 0
    %1065 = vmatpush1.bf16.msra.mxu0 0
    %1066 = vmatprep.subr.bf16.mxu0 0
    %1067 = vmatpush1.bf16.msra.mxu0 0
    %1068 = vmatprep.subr.bf16.mxu0 0
    %1069 = vmatpush1.bf16.msra.mxu0 0
    %1070 = vmatprep.subr.bf16.mxu0 0
    %1071 = vmatpush1.bf16.msra.mxu0 0
    %1072 = vmatprep.subr.bf16.mxu0 0
    %1073 = vmatpush1.bf16.msra.mxu0 0
    %1074 = vmatprep.subr.bf16.mxu0 0
    %1075 = vmatpush1.bf16.msra.mxu0 0
    %1076 = vmatprep.subr.bf16.mxu0 0
    %1077 = vmatpush1.bf16.msra.mxu0 0
    %1078 = vmatprep.subr.bf16.mxu0 0
    %1079 = vmatpush1.bf16.msra.mxu0 0
    %1080 = vmatprep.mubr.bf16.mxu0 0
    %1081 = vmatmul.mubr.bf16.gmra.mrb[0].mxu0 %v993
    %v1082 = vpop.f32.mrb[0].mxu0
    %v1083 = vadd.f32 0.0, %v1082
    %v1084 = vpop.f32.mrb[0].mxu0
    %v1085 = vadd.f32 0.0, %v1084
    %v1086 = vpop.f32.mrb[0].mxu0
    %v1087 = vpop.f32.mrb[0].mxu0
    %1088 = vdwg.mxu0
    %v1089 = vadd.f32 %v975, %v1042
    %v1090 = vadd.f32 %v976, %v1044
    %v1091 = vadd.f32 %v977, %v1083
    %v1092 = vadd.f32 %v978, %v1085
    %v1093 = vld [vmem:[%s7 + $0x30] sm:$0xff]
    %v1094 = vld [vmem:[%s7 + $0x38] sm:$0xff]
    %v1095 = vrot.slane %v728, 3
    %v1098 = vunpack.c.l.b16 %v1093
    %v1099 = vunpack.c.h.b16 %v1093
    %v1100 = vunpack.c.l.b16 %v1094
    %v1101 = vunpack.c.h.b16 %v1094
    %v1102 = vpack.c.b16 %v1098, %v1098
    %v1103 = vpack.c.b16 %v1099, %v1099
    %v1104 = vpack.c.b16 %v1100, %v1100
    %v1105 = vpack.c.b16 %v1101, %v1101
    %v1107 = vsel %vm265, %v1095, 0
    %v1110 = vsel %vm272, %v1102, 0
    %v1113 = vsel %vm272, %v1103, 0
    %v1116 = vsel %vm272, %v1104, 0
    %v1119 = vsel %vm272, %v1105, 0
    %1121 = vmatprep.subr.bf16.mxu0 %v1113
    %1122 = vmatpush1.bf16.msra.mxu0 %v1110
    %1123 = vmatprep.subr.bf16.mxu0 0
    %1124 = vmatpush1.bf16.msra.mxu0 0
    %1125 = vmatprep.subr.bf16.mxu0 0
    %1126 = vmatpush1.bf16.msra.mxu0 0
    %1127 = vmatprep.subr.bf16.mxu0 0
    %1128 = vmatpush1.bf16.msra.mxu0 0
    %1129 = vmatprep.subr.bf16.mxu0 0
    %1130 = vmatpush1.bf16.msra.mxu0 0
    %1131 = vmatprep.subr.bf16.mxu0 0
    %1132 = vmatpush1.bf16.msra.mxu0 0
    %1133 = vmatprep.subr.bf16.mxu0 0
    %1134 = vmatpush1.bf16.msra.mxu0 0
    %1135 = vmatprep.subr.bf16.mxu0 0
    %1136 = vmatpush1.bf16.msra.mxu0 0
    %1137 = vmatprep.subr.bf16.mxu0 0
    %1138 = vmatpush1.bf16.msra.mxu0 0
    %1139 = vmatprep.subr.bf16.mxu0 0
    %1140 = vmatpush1.bf16.msra.mxu0 0
    %1141 = vmatprep.subr.bf16.mxu0 0
    %1142 = vmatpush1.bf16.msra.mxu0 0
    %1143 = vmatprep.subr.bf16.mxu0 0
    %1144 = vmatpush1.bf16.msra.mxu0 0
    %1145 = vmatprep.subr.bf16.mxu0 0
    %1146 = vmatpush1.bf16.msra.mxu0 0
    %1147 = vmatprep.subr.bf16.mxu0 0
    %1148 = vmatpush1.bf16.msra.mxu0 0
    %1149 = vmatprep.subr.bf16.mxu0 0
    %1150 = vmatpush1.bf16.msra.mxu0 0
    %1151 = vmatprep.subr.bf16.mxu0 0
    %1152 = vmatpush1.bf16.msra.mxu0 0
    %1153 = vmatprep.mubr.bf16.mxu0 0
    %1154 = vmatmul.mubr.bf16.gmra.mrb[0].mxu0 %v1107
    %v1155 = vpop.f32.mrb[0].mxu0
    %v1156 = vadd.f32 0.0, %v1155
    %v1157 = vpop.f32.mrb[0].mxu0
    %v1158 = vadd.f32 0.0, %v1157
    %v1159 = vpop.f32.mrb[0].mxu0
    %v1160 = vpop.f32.mrb[0].mxu0
    %1161 = vdwg.mxu0
    %1162 = vmatprep.subr.bf16.mxu0 %v1119
    %1163 = vmatpush1.bf16.msra.mxu0 %v1116
    %1164 = vmatprep.subr.bf16.mxu0 0
    %1165 = vmatpush1.bf16.msra.mxu0 0
    %1166 = vmatprep.subr.bf16.mxu0 0
    %1167 = vmatpush1.bf16.msra.mxu0 0
    %1168 = vmatprep.subr.bf16.mxu0 0
    %1169 = vmatpush1.bf16.msra.mxu0 0
    %1170 = vmatprep.subr.bf16.mxu0 0
    %1171 = vmatpush1.bf16.msra.mxu0 0
    %1172 = vmatprep.subr.bf16.mxu0 0
    %1173 = vmatpush1.bf16.msra.mxu0 0
    %1174 = vmatprep.subr.bf16.mxu0 0
    %1175 = vmatpush1.bf16.msra.mxu0 0
    %1176 = vmatprep.subr.bf16.mxu0 0
    %1177 = vmatpush1.bf16.msra.mxu0 0
    %1178 = vmatprep.subr.bf16.mxu0 0
    %1179 = vmatpush1.bf16.msra.mxu0 0
    %1180 = vmatprep.subr.bf16.mxu0 0
    %1181 = vmatpush1.bf16.msra.mxu0 0
    %1182 = vmatprep.subr.bf16.mxu0 0
    %1183 = vmatpush1.bf16.msra.mxu0 0
    %1184 = vmatprep.subr.bf16.mxu0 0
    %1185 = vmatpush1.bf16.msra.mxu0 0
    %1186 = vmatprep.subr.bf16.mxu0 0
    %1187 = vmatpush1.bf16.msra.mxu0 0
    %1188 = vmatprep.subr.bf16.mxu0 0
    %1189 = vmatpush1.bf16.msra.mxu0 0
    %1190 = vmatprep.subr.bf16.mxu0 0
    %1191 = vmatpush1.bf16.msra.mxu0 0
    %1192 = vmatprep.subr.bf16.mxu0 0
    %1193 = vmatpush1.bf16.msra.mxu0 0
    %1194 = vmatprep.mubr.bf16.mxu0 0
    %1195 = vmatmul.mubr.bf16.gmra.mrb[0].mxu0 %v1107
    %v1196 = vpop.f32.mrb[0].mxu0
    %v1197 = vadd.f32 0.0, %v1196
    %v1198 = vpop.f32.mrb[0].mxu0
    %v1199 = vadd.f32 0.0, %v1198
    %v1200 = vpop.f32.mrb[0].mxu0
    %v1201 = vpop.f32.mrb[0].mxu0
    %1202 = vdwg.mxu0
    %v1203 = vadd.f32 %v1089, %v1156
    %v1204 = vadd.f32 %v1090, %v1158
    %v1205 = vadd.f32 %v1091, %v1197
    %v1206 = vadd.f32 %v1092, %v1199
    %v1207 = vmax.f32 %v1203, 0.0
    %v1208 = vmax.f32 %v1204, 0.0
    %v1209 = vmax.f32 %v1205, 0.0
    %v1210 = vmax.f32 %v1206, 0.0
    %v1211 = vpack.c.bf16 %v1207, %v1207
    %v1212 = vpack.c.bf16 %v1208, %v1208
    %v1213 = vpack.c.bf16 %v1209, %v1209
    %v1214 = vpack.c.bf16 %v1210, %v1210
    %v1215 = vld [vmem:[%s9] sm:$0xf]
    %v1216 = vld [vmem:[%s9 + $0x4] sm:$0xf]
    %v1217 = vld [vmem:[%s9 + $0x8] sm:$0xf]
    %v1218 = vld [vmem:[%s9 + $0xc] sm:$0xf]
    %v1219 = vld [vmem:[%s9 + $0x10] sm:$0xf]
    %v1220 = vld [vmem:[%s9 + $0x14] sm:$0xf]
    %v1221 = vld [vmem:[%s9 + $0x18] sm:$0xf]
    %v1222 = vld [vmem:[%s9 + $0x1c] sm:$0xf]
    %v1223 = vld [vmem:[%s9 + $0x20] sm:$0xf]
    %v1224 = vld [vmem:[%s9 + $0x24] sm:$0xf]
    %v1225 = vld [vmem:[%s9 + $0x28] sm:$0xf]
    %v1226 = vld [vmem:[%s9 + $0x2c] sm:$0xf]
    %v1227 = vld [vmem:[%s9 + $0x30] sm:$0xf]
    %v1228 = vld [vmem:[%s9 + $0x34] sm:$0xf]
    %v1229 = vld [vmem:[%s9 + $0x38] sm:$0xf]
    %v1230 = vld [vmem:[%s9 + $0x3c] sm:$0xf]
    %v1231 = vld [vmem:[%s9 + $0x40] sm:$0xf]
    %v1232 = vld [vmem:[%s9 + $0x44] sm:$0xf]
    %v1233 = vld [vmem:[%s9 + $0x48] sm:$0xf]
    %v1234 = vld [vmem:[%s9 + $0x4c] sm:$0xf]
    %v1235 = vld [vmem:[%s9 + $0x50] sm:$0xf]
    %v1236 = vld [vmem:[%s9 + $0x54] sm:$0xf]
    %v1237 = vld [vmem:[%s9 + $0x58] sm:$0xf]
    %v1238 = vld [vmem:[%s9 + $0x5c] sm:$0xf]
    %v1239 = vld [vmem:[%s9 + $0x60] sm:$0xf]
    %v1240 = vld [vmem:[%s9 + $0x64] sm:$0xf]
    %v1241 = vld [vmem:[%s9 + $0x68] sm:$0xf]
    %v1242 = vld [vmem:[%s9 + $0x6c] sm:$0xf]
    %v1243 = vld [vmem:[%s9 + $0x70] sm:$0xf]
    %v1244 = vld [vmem:[%s9 + $0x74] sm:$0xf]
    %v1245 = vld [vmem:[%s9 + $0x78] sm:$0xf]
    %v1246 = vld [vmem:[%s9 + $0x7c] sm:$0xf]
    %v1247 = vld [vmem:[%s9 + $0x80] sm:$0xf]
    %v1248 = vld [vmem:[%s9 + $0x84] sm:$0xf]
    %v1249 = vld [vmem:[%s9 + $0x88] sm:$0xf]
    %v1250 = vld [vmem:[%s9 + $0x8c] sm:$0xf]
    %v1251 = vld [vmem:[%s9 + $0x90] sm:$0xf]
    %v1252 = vld [vmem:[%s9 + $0x94] sm:$0xf]
    %v1253 = vld [vmem:[%s9 + $0x98] sm:$0xf]
    %v1254 = vld [vmem:[%s9 + $0x9c] sm:$0xf]
    %v1255 = vld [vmem:[%s9 + $0xa0] sm:$0xf]
    %v1256 = vld [vmem:[%s9 + $0xa4] sm:$0xf]
    %v1257 = vld [vmem:[%s9 + $0xa8] sm:$0xf]
    %v1258 = vld [vmem:[%s9 + $0xac] sm:$0xf]
    %v1259 = vld [vmem:[%s9 + $0xb0] sm:$0xf]
    %v1260 = vld [vmem:[%s9 + $0xb4] sm:$0xf]
    %v1261 = vld [vmem:[%s9 + $0xb8] sm:$0xf]
    %v1262 = vld [vmem:[%s9 + $0xbc] sm:$0xf]
    %v1263 = vld [vmem:[%s9 + $0xc0] sm:$0xf]
    %v1264 = vld [vmem:[%s9 + $0xc4] sm:$0xf]
    %v1265 = vld [vmem:[%s9 + $0xc8] sm:$0xf]
    %v1266 = vld [vmem:[%s9 + $0xcc] sm:$0xf]
    %v1267 = vld [vmem:[%s9 + $0xd0] sm:$0xf]
    %v1268 = vld [vmem:[%s9 + $0xd4] sm:$0xf]
    %v1269 = vld [vmem:[%s9 + $0xd8] sm:$0xf]
    %v1270 = vld [vmem:[%s9 + $0xdc] sm:$0xf]
    %v1271 = vld [vmem:[%s9 + $0xe0] sm:$0xf]
    %v1272 = vld [vmem:[%s9 + $0xe4] sm:$0xf]
    %v1273 = vld [vmem:[%s9 + $0xe8] sm:$0xf]
    %v1274 = vld [vmem:[%s9 + $0xec] sm:$0xf]
    %v1275 = vld [vmem:[%s9 + $0xf0] sm:$0xf]
    %v1276 = vld [vmem:[%s9 + $0xf4] sm:$0xf]
    %v1277 = vld [vmem:[%s9 + $0xf8] sm:$0xf]
    %v1278 = vld [vmem:[%s9 + $0xfc] sm:$0xf]
    %v1279 = vld [vmem:[%s10] sm:$0x1]
    %v1281 = vlaneseq
    %v1282 = vshrl.u32 %v1281, 7
    %v1283 = vsub.s32 0, %v1282
    %v1284 = vrot.slane %v1279, %v1283
    %v1350 = vunpack.c.l.b16 %v1215
    %v1351 = vunpack.c.l.b16 %v1216
    %v1352 = vunpack.c.l.b16 %v1217
    %v1353 = vunpack.c.l.b16 %v1218
    %v1354 = vunpack.c.l.b16 %v1219
    %v1355 = vunpack.c.l.b16 %v1220
    %v1356 = vunpack.c.l.b16 %v1221
    %v1357 = vunpack.c.l.b16 %v1222
    %v1358 = vunpack.c.l.b16 %v1223
    %v1359 = vunpack.c.l.b16 %v1224
    %v1360 = vunpack.c.l.b16 %v1225
    %v1361 = vunpack.c.l.b16 %v1226
    %v1362 = vunpack.c.l.b16 %v1227
    %v1363 = vunpack.c.l.b16 %v1228
    %v1364 = vunpack.c.l.b16 %v1229
    %v1365 = vunpack.c.l.b16 %v1230
    %v1366 = vunpack.c.l.b16 %v1231
    %v1367 = vunpack.c.l.b16 %v1232
    %v1368 = vunpack.c.l.b16 %v1233
    %v1369 = vunpack.c.l.b16 %v1234
    %v1370 = vunpack.c.l.b16 %v1235
    %v1371 = vunpack.c.l.b16 %v1236
    %v1372 = vunpack.c.l.b16 %v1237
    %v1373 = vunpack.c.l.b16 %v1238
    %v1374 = vunpack.c.l.b16 %v1239
    %v1375 = vunpack.c.l.b16 %v1240
    %v1376 = vunpack.c.l.b16 %v1241
    %v1377 = vunpack.c.l.b16 %v1242
    %v1378 = vunpack.c.l.b16 %v1243
    %v1379 = vunpack.c.l.b16 %v1244
    %v1380 = vunpack.c.l.b16 %v1245
    %v1381 = vunpack.c.l.b16 %v1246
    %v1382 = vunpack.c.l.b16 %v1247
    %v1383 = vunpack.c.l.b16 %v1248
    %v1384 = vunpack.c.l.b16 %v1249
    %v1385 = vunpack.c.l.b16 %v1250
    %v1386 = vunpack.c.l.b16 %v1251
    %v1387 = vunpack.c.l.b16 %v1252
    %v1388 = vunpack.c.l.b16 %v1253
    %v1389 = vunpack.c.l.b16 %v1254
    %v1390 = vunpack.c.l.b16 %v1255
    %v1391 = vunpack.c.l.b16 %v1256
    %v1392 = vunpack.c.l.b16 %v1257
    %v1393 = vunpack.c.l.b16 %v1258
    %v1394 = vunpack.c.l.b16 %v1259
    %v1395 = vunpack.c.l.b16 %v1260
    %v1396 = vunpack.c.l.b16 %v1261
    %v1397 = vunpack.c.l.b16 %v1262
    %v1398 = vunpack.c.l.b16 %v1263
    %v1399 = vunpack.c.l.b16 %v1264
    %v1400 = vunpack.c.l.b16 %v1265
    %v1401 = vunpack.c.l.b16 %v1266
    %v1402 = vunpack.c.l.b16 %v1267
    %v1403 = vunpack.c.l.b16 %v1268
    %v1404 = vunpack.c.l.b16 %v1269
    %v1405 = vunpack.c.l.b16 %v1270
    %v1406 = vunpack.c.l.b16 %v1271
    %v1407 = vunpack.c.l.b16 %v1272
    %v1408 = vunpack.c.l.b16 %v1273
    %v1409 = vunpack.c.l.b16 %v1274
    %v1410 = vunpack.c.l.b16 %v1275
    %v1411 = vunpack.c.l.b16 %v1276
    %v1412 = vunpack.c.l.b16 %v1277
    %v1413 = vunpack.c.l.b16 %v1278
    %v1414 = vpack.c.b16 %v1351, %v1350
    %v1415 = vpack.c.b16 %v1353, %v1352
    %v1416 = vpack.c.b16 %v1355, %v1354
    %v1417 = vpack.c.b16 %v1357, %v1356
    %v1418 = vpack.c.b16 %v1359, %v1358
    %v1419 = vpack.c.b16 %v1361, %v1360
    %v1420 = vpack.c.b16 %v1363, %v1362
    %v1421 = vpack.c.b16 %v1365, %v1364
    %v1422 = vpack.c.b16 %v1367, %v1366
    %v1423 = vpack.c.b16 %v1369, %v1368
    %v1424 = vpack.c.b16 %v1371, %v1370
    %v1425 = vpack.c.b16 %v1373, %v1372
    %v1426 = vpack.c.b16 %v1375, %v1374
    %v1427 = vpack.c.b16 %v1377, %v1376
    %v1428 = vpack.c.b16 %v1379, %v1378
    %v1429 = vpack.c.b16 %v1381, %v1380
    %v1430 = vpack.c.b16 %v1383, %v1382
    %v1431 = vpack.c.b16 %v1385, %v1384
    %v1432 = vpack.c.b16 %v1387, %v1386
    %v1433 = vpack.c.b16 %v1389, %v1388
    %v1434 = vpack.c.b16 %v1391, %v1390
    %v1435 = vpack.c.b16 %v1393, %v1392
    %v1436 = vpack.c.b16 %v1395, %v1394
    %v1437 = vpack.c.b16 %v1397, %v1396
    %v1438 = vpack.c.b16 %v1399, %v1398
    %v1439 = vpack.c.b16 %v1401, %v1400
    %v1440 = vpack.c.b16 %v1403, %v1402
    %v1441 = vpack.c.b16 %v1405, %v1404
    %v1442 = vpack.c.b16 %v1407, %v1406
    %v1443 = vpack.c.b16 %v1409, %v1408
    %v1444 = vpack.c.b16 %v1411, %v1410
    %v1445 = vpack.c.b16 %v1413, %v1412
    %1478 = vmatprep.subr.bf16.mxu0 0
    %1479 = vmatpush1.bf16.msra.mxu0 %v1414
    %1480 = vmatprep.subr.bf16.mxu0 0
    %1481 = vmatpush1.bf16.msra.mxu0 %v1415
    %1482 = vmatprep.subr.bf16.mxu0 0
    %1483 = vmatpush1.bf16.msra.mxu0 %v1416
    %1484 = vmatprep.subr.bf16.mxu0 0
    %1485 = vmatpush1.bf16.msra.mxu0 %v1417
    %1486 = vmatprep.subr.bf16.mxu0 0
    %1487 = vmatpush1.bf16.msra.mxu0 %v1418
    %1488 = vmatprep.subr.bf16.mxu0 0
    %1489 = vmatpush1.bf16.msra.mxu0 %v1419
    %1490 = vmatprep.subr.bf16.mxu0 0
    %1491 = vmatpush1.bf16.msra.mxu0 %v1420
    %1492 = vmatprep.subr.bf16.mxu0 0
    %1493 = vmatpush1.bf16.msra.mxu0 %v1421
    %1494 = vmatprep.subr.bf16.mxu0 0
    %1495 = vmatpush1.bf16.msra.mxu0 %v1422
    %1496 = vmatprep.subr.bf16.mxu0 0
    %1497 = vmatpush1.bf16.msra.mxu0 %v1423
    %1498 = vmatprep.subr.bf16.mxu0 0
    %1499 = vmatpush1.bf16.msra.mxu0 %v1424
    %1500 = vmatprep.subr.bf16.mxu0 0
    %1501 = vmatpush1.bf16.msra.mxu0 %v1425
    %1502 = vmatprep.subr.bf16.mxu0 0
    %1503 = vmatpush1.bf16.msra.mxu0 %v1426
    %1504 = vmatprep.subr.bf16.mxu0 0
    %1505 = vmatpush1.bf16.msra.mxu0 %v1427
    %1506 = vmatprep.subr.bf16.mxu0 0
    %1507 = vmatpush1.bf16.msra.mxu0 %v1428
    %1508 = vmatprep.subr.bf16.mxu0 0
    %1509 = vmatpush1.bf16.msra.mxu0 %v1429
    %1510 = vmatprep.mubr.bf16.mxu0 %v1212
    %1511 = vmatmul.mubr.bf16.gmra.mrb[0].mxu0 %v1211
    %v1512 = vpop.f32.mrb[0].mxu0
    %v1513 = vadd.f32 %v1284, %v1512
    %v1514 = vpop.f32.mrb[0].mxu0
    %v1515 = vpop.f32.mrb[0].mxu0
    %v1516 = vpop.f32.mrb[0].mxu0
    %1517 = vdwg.mxu0
    %1518 = vmatprep.subr.bf16.mxu0 0
    %1519 = vmatpush1.bf16.msra.mxu0 %v1430
    %1520 = vmatprep.subr.bf16.mxu0 0
    %1521 = vmatpush1.bf16.msra.mxu0 %v1431
    %1522 = vmatprep.subr.bf16.mxu0 0
    %1523 = vmatpush1.bf16.msra.mxu0 %v1432
    %1524 = vmatprep.subr.bf16.mxu0 0
    %1525 = vmatpush1.bf16.msra.mxu0 %v1433
    %1526 = vmatprep.subr.bf16.mxu0 0
    %1527 = vmatpush1.bf16.msra.mxu0 %v1434
    %1528 = vmatprep.subr.bf16.mxu0 0
    %1529 = vmatpush1.bf16.msra.mxu0 %v1435
    %1530 = vmatprep.subr.bf16.mxu0 0
    %1531 = vmatpush1.bf16.msra.mxu0 %v1436
    %1532 = vmatprep.subr.bf16.mxu0 0
    %1533 = vmatpush1.bf16.msra.mxu0 %v1437
    %1534 = vmatprep.subr.bf16.mxu0 0
    %1535 = vmatpush1.bf16.msra.mxu0 %v1438
    %1536 = vmatprep.subr.bf16.mxu0 0
    %1537 = vmatpush1.bf16.msra.mxu0 %v1439
    %1538 = vmatprep.subr.bf16.mxu0 0
    %1539 = vmatpush1.bf16.msra.mxu0 %v1440
    %1540 = vmatprep.subr.bf16.mxu0 0
    %1541 = vmatpush1.bf16.msra.mxu0 %v1441
    %1542 = vmatprep.subr.bf16.mxu0 0
    %1543 = vmatpush1.bf16.msra.mxu0 %v1442
    %1544 = vmatprep.subr.bf16.mxu0 0
    %1545 = vmatpush1.bf16.msra.mxu0 %v1443
    %1546 = vmatprep.subr.bf16.mxu0 0
    %1547 = vmatpush1.bf16.msra.mxu0 %v1444
    %1548 = vmatprep.subr.bf16.mxu0 0
    %1549 = vmatpush1.bf16.msra.mxu0 %v1445
    %1550 = vmatprep.mubr.bf16.mxu0 %v1214
    %1551 = vmatmul.mubr.bf16.gmra.mrb[0].mxu0 %v1213
    %v1552 = vpop.f32.mrb[0].mxu0
    %v1553 = vadd.f32 %v1513, %v1552
    %v1554 = vpop.f32.mrb[0].mxu0
    %v1555 = vpop.f32.mrb[0].mxu0
    %v1556 = vpop.f32.mrb[0].mxu0
    %1557 = vdwg.mxu0
    %v1558 = vmax.f32 %v1553, 0.0
    %1559 = vst [vmem:[#allocation2] sm:$0x3] %v1558
    // Predicated region
    $region46: #{encoder_forward.1} parent=1 // pred_check
      _
    $region47: #{encoder_forward.1} parent=1 // pred_check_branch
      %1561 = sbr.rel (0) target = $region49
    $region48: #{encoder_forward.1} parent=1 // pred_region
      %s1563 = ssub.s32 32, 32
      %1564 = vsyncadd [#allocation3], %s1563
      %s1566 = sshll.u32 [#allocation2], 4
      %s1567 = int_to_ptr.vmem [resolvable:$true] %s1566
      %1569 = dma.vmem_to_hbm [thread:$0]  %s1567, 32, %s11, [#allocation3]
    $region49: #{encoder_forward.1} parent=1 // pred_fallthru
      _
    // Predicated region
    $region50: #{encoder_forward.1} parent=1 // pred_check
      _
    $region51: #{encoder_forward.1} parent=1 // pred_check_branch
      %1571 = sbr.rel (0) target = $region53
    $region52: #{encoder_forward.1} parent=1 // pred_region
      %1572 = dma.done [#allocation3], 32
    $region53: #{encoder_forward.1} parent=1 // pred_fallthru
      _
    %1573 = vsyncpa [#allocation3], 1

</llo_original>
